<compile_context>
chip_gen: v6e
topology: v6e:2x2x1
jax: 0.10.0
libtpu: 0.0.40
codegen_flags: <defaults>
</compile_context>

<pallas_src>
import functools

import jax
import jax.numpy as jnp
import numpy as np
from jax import lax
from jax.experimental import pallas as pl
from jax.experimental.pallas import tpu as pltpu

_TOP = 8   # top slack rows in every activation slab (keeps big accesses aligned)
_BOT = 8   # bottom slack rows

ACT_DTYPE = jnp.float32   # set jnp.bfloat16 on v6e/v7x (validate at ~3e-2)


def _round_up(x, m):
    return -(-x // m) * m


# ------------------------------ Pallas kernel --------------------------------

def _up_fused_kernel(x1c_ref, x2p_ref, upw_ref, upb_ref, fmask_ref,
                     b1a_ref, b1b_ref, b2_ref, pool_ref, poolt_ref,
                     rmask_ref, g1_ref, bt1_ref, g2_ref, bt2_ref,
                     o_ref, x1p_ref, y1p_ref, *, dims):
    """Fused Up block.  All matmuls hit the MXU with 128-lane-dense operands."""
    N, H, W, Himg, Cout = dims
    R = N * Himg                                  # canvas rows per call
    Wout = W * Cout
    inv_cnt = 1.0 / float(N * H * W)              # BN population size
    f32 = jnp.float32
    act_dt = x1p_ref.dtype

    # ---- Stage 1: ConvTranspose2d(k=2, s=2).  The LHS canvas is already row-
    #      interleaved (wrapper plumbing), so ONE matmul produces the upsampled
    #      slab in spatial order; a single masked full-slab store replaces the
    #      old 2*N*H1 single-row scatters. ------------------------------------
    fine = jnp.dot(x1c_ref[...], upw_ref[...], preferred_element_type=f32)
    x1p_ref[...] = ((fine + upb_ref[...]) * fmask_ref[...]).astype(act_dt)

    rmask = rmask_ref[...]                        # (R, 1): 1.0 on interior rows
    pool = pool_ref[...]                          # (W*Cout, Cout) channel pooling
    poolt = poolt_ref[...]                        # (Cout, W*Cout)

    def conv_bn_relu(taps, g, beta):
        # taps: list of (activation Ref, (3, K, W*Cout) banded-weight Ref).
        # kh taps = row-shifted Ref loads; kw taps live inside the weights.
        acc = jnp.zeros((R, Wout), dtype=f32)
        for dh in range(3):
            lo = _TOP - 1 + dh
            for x_ref, b_ref in taps:
                acc = acc + jnp.dot(x_ref[lo:lo + R, :], b_ref[dh],
                                    preferred_element_type=f32)
        # Train-mode BatchNorm (biased variance) over the N*H*W interior pixels.
        # Stats pooled with a single M=2 matmul (sum, sum_sq stacked).
        m = acc * rmask
        sums = jnp.concatenate([jnp.sum(m, axis=0, keepdims=True),
                                jnp.sum(m * m, axis=0, keepdims=True)], axis=0)
        st = jnp.dot(sums, pool, preferred_element_type=f32) * inv_cnt  # (2, Cout)
        mean = st[0:1, :]
        var = st[1:2, :] - mean * mean
        scale = g * lax.rsqrt(var + 1e-5)                               # (1, Cout)
        shift = beta - mean * scale
        qs = jnp.dot(jnp.concatenate([scale, shift], axis=0), poolt,
                     preferred_element_type=f32)                        # (2, W*Cout)
        return jnp.maximum(acc * qs[0:1, :] + qs[1:2, :], 0.0) * rmask  # (R, W*Cout)

    # ---- Stage 2: Conv3x3 -> BN -> ReLU over [x2-half | upsampled-x1-half]. --
    y1 = conv_bn_relu([(x2p_ref, b1a_ref), (x1p_ref, b1b_ref)],
                      g1_ref[...], bt1_ref[...])
    # Only the slack rows need zeroing (y1's pad rows are already zero via rmask).
    y1p_ref[0:_TOP, :] = jnp.zeros((_TOP, Wout), act_dt)
    y1p_ref[_TOP + R:_TOP + R + _BOT, :] = jnp.zeros((_BOT, Wout), act_dt)
    y1p_ref[_TOP:_TOP + R, :] = y1.astype(act_dt)

    # ---- Stage 3: second Conv3x3 -> BN -> ReLU. ------------------------------
    y2 = conv_bn_relu([(y1p_ref, b2_ref)], g2_ref[...], bt2_ref[...])

    # ---- Lane-dense output slab: rows = (n, h), cols = (w, co).  Source and
    #      destination row offsets are 8-aligned (Himg, H multiples of 8). -----
    for n in range(N):
        o_ref[n * H:(n + 1) * H, :] = y2[n * Himg:n * Himg + H, :]


# --------------------- one-time weight restructuring --------------------------

def prepare_up_params(p, x1_shape, x2_shape, act_dtype=ACT_DTYPE):
    """Restructure Up's weights into MXU-friendly operands.

    Depends only on the parameter set and static shapes -> call once and reuse
    the returned dict across forward calls (avoids re-running these einsums and
    re-DMAing them every invocation).
    """
    f32 = jnp.float32
    hi = lax.Precision.HIGHEST
    N, Cin, H1, W1 = x1_shape
    Cup = Cin // 2
    _, _, H, W = x2_shape
    Cout = p["c1_w"].shape[0]
    diff_h, diff_w = H - 2 * H1, W - 2 * W1
    ph, pw = diff_h // 2, diff_w // 2
    Himg = _round_up(H + 1, 8)            # 8-aligned per-image row stride
    R = N * Himg
    Rtot = _TOP + R + _BOT

    # ConvTranspose2d weights -> one block matrix; row blocks = fine-row parity
    # a, columns ordered (fine x, co).
    eye_w1 = jnp.eye(W1, dtype=f32)
    upw = [jnp.einsum("jk,cob->jckbo", eye_w1, p["up_w"][:, :, a, :],
                      precision=hi).reshape(W1 * Cin, 2 * W1 * Cup)
           for a in range(2)]
    upw_cat = jnp.concatenate(upw, axis=0).astype(act_dtype)    # (2*W1*Cin, 2*W1*Cup)
    upb = jnp.tile(p["up_b"], 2 * W1).reshape(1, 2 * W1 * Cup).astype(f32)

    # 3x3 convs -> banded block-Toeplitz matrices, one (K*Cpart, W*Cout) per kh;
    # kw taps and the W axis are folded into the lane dimension.  `off` is the
    # column offset of that input half inside the (zero-padded) canvas.
    def banded(wt, K, off):
        sel = np.zeros((3, K, W), np.float32)
        for dw in range(3):
            for w in range(W):
                k = w + dw - 1 - off
                if 0 <= k < K:
                    sel[dw, k, w] = 1.0
        b = jnp.einsum("hdco,dkw->hkcwo", wt, jnp.asarray(sel), precision=hi)
        return b.reshape(3, K * wt.shape[2], W * wt.shape[3]).astype(act_dtype)

    w1t = jnp.transpose(p["c1_w"], (2, 3, 1, 0))   # (3, 3, Cin,  Cout)
    w2t = jnp.transpose(p["c2_w"], (2, 3, 1, 0))   # (3, 3, Cout, Cout)
    b1a = banded(w1t[:, :, :Cup, :], W, 0)         # x2 half of the concat
    b1b = banded(w1t[:, :, Cup:, :], 2 * W1, pw)   # upsampled-x1 half (F.pad offset)
    b2 = banded(w2t, W, 0)

    pool = jnp.tile(jnp.eye(Cout, dtype=f32), (W, 1))   # (W*Cout, Cout)
    poolt = jnp.transpose(pool)

    # Row masks: interior image rows (BN stats / pad-row zeroing) and fine
    # (upsampled-x1) rows inside the padded canvas.
    rm = np.zeros((R, 1), np.float32)
    fm = np.zeros((Rtot, 1), np.float32)
    for n in range(N):
        rm[n * Himg:n * Himg + H, 0] = 1.0
        fm[_TOP + n * Himg + ph:_TOP + n * Himg + ph + 2 * H1, 0] = 1.0

    # NOTE: p["c1_b"] / p["c2_b"] intentionally unused: per-channel conv biases
    # cancel exactly under train-mode (batch-statistics) BatchNorm.
    return dict(
        upw=upw_cat, upb=upb, b1a=b1a, b1b=b1b, b2=b2,
        pool=pool, poolt=poolt,
        rmask=jnp.asarray(rm), fmask=jnp.asarray(fm),
        g1=p["bn1_g"].reshape(1, Cout).astype(f32),
        bt1=p["bn1_b"].reshape(1, Cout).astype(f32),
        g2=p["bn2_g"].reshape(1, Cout).astype(f32),
        bt2=p["bn2_b"].reshape(1, Cout).astype(f32),
        dims=(N, H, W, Himg, Cout),
        meta=(H1, W1, Cup, ph, Rtot),
        act_dtype=act_dtype,
    )


# ------------------------------ JAX wrapper -----------------------------------

def up_forward(x1, x2, prep):
    """Pallas implementation of Up.forward(x1, x2).  x1, x2 are NCHW float32."""
    N, H, W, Himg, Cout = prep["dims"]
    H1, W1, Cup, ph, Rtot = prep["meta"]
    Cin = 2 * Cup
    R = N * Himg
    act_dtype = prep["act_dtype"]
    f32 = jnp.float32

    # ---------------- activation layout plumbing (cheap, one pass) ------------
    # x2 skip connection: rows = (n, h) at stride Himg, cols = (w, c).
    x2n = jnp.transpose(x2, (0, 2, 3, 1)).reshape(N, H, W * Cup)
    x2n = jnp.pad(x2n, ((0, 0), (0, Himg - H), (0, 0)))
    x2p = jnp.pad(x2n.reshape(N * Himg, W * Cup),
                  ((_TOP, _BOT), (0, 0))).astype(act_dtype)

    # x1 coarse map -> pre-interleaved LHS canvas for the transposed conv: the
    # row for fine row f = 2*i + a carries coarse row i in column block a, so
    # the in-kernel matmul output is already in spatial (row-interleaved) order.
    x1r = jnp.transpose(x1, (0, 2, 3, 1)).reshape(N, H1, W1 * Cin)
    z = jnp.zeros_like(x1r)
    lhs = jnp.stack([jnp.concatenate([x1r, z], axis=-1),
                     jnp.concatenate([z, x1r], axis=-1)], axis=2)
    lhs = lhs.reshape(N, 2 * H1, 2 * W1 * Cin)
    lhs = jnp.pad(lhs, ((0, 0), (ph, Himg - ph - 2 * H1), (0, 0)))
    x1c = jnp.pad(lhs.reshape(N * Himg, 2 * W1 * Cin),
                  ((_TOP, _BOT), (0, 0))).astype(act_dtype)

    kernel = functools.partial(_up_fused_kernel, dims=prep["dims"])
    vmem = pl.BlockSpec(memory_space=pltpu.MemorySpace.VMEM)

    operands = (x1c, x2p, prep["upw"], prep["upb"], prep["fmask"],
                prep["b1a"], prep["b1b"], prep["b2"], prep["pool"],
                prep["poolt"], prep["rmask"], prep["g1"], prep["bt1"],
                prep["g2"], prep["bt2"])
    flops = int(2 * Rtot * (2 * W1 * Cin) * (2 * W1 * Cup)
                + 2 * R * 3 * (W * Cup + 2 * W1 * Cup) * (W * Cout)
                + 2 * R * 3 * (W * Cout) * (W * Cout))
    bytes_accessed = int(sum(a.size * a.dtype.itemsize for a in operands)
                         + N * H * W * Cout * 4)

    out2d = pl.pallas_call(
        kernel,
        out_shape=jax.ShapeDtypeStruct((N * H, W * Cout), f32),
        in_specs=[vmem] * len(operands),
        out_specs=vmem,
        scratch_shapes=[pltpu.VMEM((Rtot, 2 * W1 * Cup), act_dtype),   # upsampled-x1 slab
                        pltpu.VMEM((Rtot, W * Cout), act_dtype)],      # conv1 output slab
        compiler_params=pltpu.CompilerParams(vmem_limit_bytes=32 * 1024 * 1024),
        cost_estimate=pl.CostEstimate(flops=flops, transcendentals=2 * Cout,
                                      bytes_accessed=bytes_accessed),
    )(*operands)

    out = out2d.reshape(N, H, W, Cout)
    return jnp.transpose(out, (0, 3, 1, 2))                      # back to NCHW


# ------------------------- Pure-JAX reference (check) -------------------------

def _bn_relu_ref(y_nchw, gamma, beta):
    mean = jnp.mean(y_nchw, axis=(0, 2, 3), keepdims=True)
    var = jnp.mean(jnp.square(y_nchw - mean), axis=(0, 2, 3), keepdims=True)
    y = (y_nchw - mean) * lax.rsqrt(var + 1e-5)
    y = y * gamma[None, :, None, None] + beta[None, :, None, None]
    return jnp.maximum(y, 0.0)


def _conv3x3_ref(x_nchw, w, b):
    y = lax.conv_general_dilated(x_nchw, w, (1, 1), ((1, 1), (1, 1)),
                                 dimension_numbers=("NCHW", "OIHW", "NCHW"),
                                 precision=lax.Precision.HIGHEST)
    return y + b[None, :, None, None]


def up_reference(x1, x2, p):
    N, Cin, H1, W1 = x1.shape
    Cup = Cin // 2
    up = jnp.einsum("ncij,cdab->ndiajb", x1, p["up_w"],
                    precision=lax.Precision.HIGHEST)
    up = up.reshape(N, Cup, 2 * H1, 2 * W1) + p["up_b"][None, :, None, None]
    diff_h = x2.shape[2] - up.shape[2]
    diff_w = x2.shape[3] - up.shape[3]
    up = jnp.pad(up, ((0, 0), (0, 0),
                      (diff_h // 2, diff_h - diff_h // 2),
                      (diff_w // 2, diff_w - diff_w // 2)))
    x = jnp.concatenate([x2, up], axis=1)
    y = _bn_relu_ref(_conv3x3_ref(x, p["c1_w"], p["c1_b"]), p["bn1_g"], p["bn1_b"])
    y = _bn_relu_ref(_conv3x3_ref(y, p["c2_w"], p["c2_b"]), p["bn2_g"], p["bn2_b"])
    return y


# --------------------------------- main ----------------------------------------

if __name__ == "__main__":
    key = jax.random.PRNGKey(0)
    keys = jax.random.split(key, 12)

    in_ch, out_ch = 16, 8
    N, H1, W1 = 2, 8, 8                      # x1: coarse feature map
    H2, W2 = 2 * H1, 2 * W1                  # x2: skip connection

    x1 = jax.random.normal(keys[0], (N, in_ch, H1, W1), jnp.float32)
    x2 = jax.random.normal(keys[1], (N, in_ch // 2, H2, W2), jnp.float32)

    params = dict(
        up_w=0.1 * jax.random.normal(keys[2], (in_ch, in_ch // 2, 2, 2), jnp.float32),
        up_b=0.1 * jax.random.normal(keys[3], (in_ch // 2,), jnp.float32),
        c1_w=0.1 * jax.random.normal(keys[4], (out_ch, in_ch, 3, 3), jnp.float32),
        c1_b=0.1 * jax.random.normal(keys[5], (out_ch,), jnp.float32),
        bn1_g=1.0 + 0.1 * jax.random.normal(keys[6], (out_ch,), jnp.float32),
        bn1_b=0.1 * jax.random.normal(keys[7], (out_ch,), jnp.float32),
        c2_w=0.1 * jax.random.normal(keys[8], (out_ch, out_ch, 3, 3), jnp.float32),
        c2_b=0.1 * jax.random.normal(keys[9], (out_ch,), jnp.float32),
        bn2_g=1.0 + 0.1 * jax.random.normal(keys[10], (out_ch,), jnp.float32),
        bn2_b=0.1 * jax.random.normal(keys[11], (out_ch,), jnp.float32),
    )

    # One-time weight restructuring, reused across forward calls.
    prep = prepare_up_params(params, x1.shape, x2.shape)

    out = up_forward(x1, x2, prep)
    jax.block_until_ready(out)

    ref = up_reference(x1, x2, params)
    np.testing.assert_allclose(np.asarray(out), np.asarray(ref), rtol=1e-2, atol=1e-2)

    print("KERNEL_OK")
</pallas_src>

<mosaic_0001>
module attributes {stable_mosaic.version = 11 : i64} {
  func.func @_up_fused_kernel(%arg0: memref<64x256xf32, #tpu.memory_space<vmem>>, %arg1: memref<64x128xf32, #tpu.memory_space<vmem>>, %arg2: memref<256x128xf32, #tpu.memory_space<vmem>>, %arg3: memref<1x128xf32, #tpu.memory_space<vmem>>, %arg4: memref<64x1xf32, #tpu.memory_space<vmem>>, %arg5: memref<3x128x128xf32, #tpu.memory_space<vmem>>, %arg6: memref<3x128x128xf32, #tpu.memory_space<vmem>>, %arg7: memref<3x128x128xf32, #tpu.memory_space<vmem>>, %arg8: memref<128x8xf32, #tpu.memory_space<vmem>>, %arg9: memref<8x128xf32, #tpu.memory_space<vmem>>, %arg10: memref<48x1xf32, #tpu.memory_space<vmem>>, %arg11: memref<1x8xf32, #tpu.memory_space<vmem>>, %arg12: memref<1x8xf32, #tpu.memory_space<vmem>>, %arg13: memref<1x8xf32, #tpu.memory_space<vmem>>, %arg14: memref<1x8xf32, #tpu.memory_space<vmem>>, %arg15: memref<32x128xf32, #tpu.memory_space<vmem>>, %arg16: memref<64x128xf32, #tpu.memory_space<vmem>>, %arg17: memref<64x128xf32, #tpu.memory_space<vmem>>) attributes {dimension_semantics = [], scalar_prefetch = 0 : i64, scratch_operands = 2 : i64, tpu.core_type = #tpu.core_type<tc>} {
    %c0 = arith.constant 0 : index
    %c0_0 = arith.constant 0 : index
    %0 = vector.load %arg0[%c0, %c0_0] : memref<64x256xf32, #tpu.memory_space<vmem>>, vector<64x256xf32>
    %c0_1 = arith.constant 0 : index
    %c0_2 = arith.constant 0 : index
    %1 = vector.load %arg2[%c0_1, %c0_2] : memref<256x128xf32, #tpu.memory_space<vmem>>, vector<256x128xf32>
    %cst = arith.constant dense<0.000000e+00> : vector<64x128xf32>
    %2 = tpu.matmul %0, %1, %cst {dimension_numbers = #tpu.dot_dimension_numbers<[1], [0], [0], [1], [0, 0, 1, 1], [], []>} : vector<64x256xf32>, vector<256x128xf32>, vector<64x128xf32> -> vector<64x128xf32>
    %c0_3 = arith.constant 0 : index
    %c0_4 = arith.constant 0 : index
    %3 = vector.load %arg3[%c0_3, %c0_4] : memref<1x128xf32, #tpu.memory_space<vmem>>, vector<1x128xf32>
    %4 = vector.broadcast %3 : vector<1x128xf32> to vector<64x128xf32>
    %5 = arith.addf %2, %4 : vector<64x128xf32>
    %c0_5 = arith.constant 0 : index
    %c0_6 = arith.constant 0 : index
    %6 = vector.load %arg4[%c0_5, %c0_6] : memref<64x1xf32, #tpu.memory_space<vmem>>, vector<64x1xf32>
    %7 = vector.broadcast %6 : vector<64x1xf32> to vector<64x128xf32>
    %8 = arith.mulf %5, %7 : vector<64x128xf32>
    %c0_7 = arith.constant 0 : index
    %c0_8 = arith.constant 0 : index
    %9 = vector.load %arg16[%c0_7, %c0_8] : memref<64x128xf32, #tpu.memory_space<vmem>>, vector<64x128xf32>
    tpu.vector_store %arg16[%c0_7, %c0_8], %8 {strides = array<i32>} : memref<64x128xf32, #tpu.memory_space<vmem>>, vector<64x128xf32>,
    %c0_9 = arith.constant 0 : index
    %c0_10 = arith.constant 0 : index
    %10 = vector.load %arg10[%c0_9, %c0_10] : memref<48x1xf32, #tpu.memory_space<vmem>>, vector<48x1xf32>
    %c0_11 = arith.constant 0 : index
    %c0_12 = arith.constant 0 : index
    %11 = vector.load %arg8[%c0_11, %c0_12] : memref<128x8xf32, #tpu.memory_space<vmem>>, vector<128x8xf32>
    %c0_13 = arith.constant 0 : index
    %c0_14 = arith.constant 0 : index
    %12 = vector.load %arg9[%c0_13, %c0_14] : memref<8x128xf32, #tpu.memory_space<vmem>>, vector<8x128xf32>
    %c0_15 = arith.constant 0 : index
    %c0_16 = arith.constant 0 : index
    %13 = vector.load %arg11[%c0_15, %c0_16] : memref<1x8xf32, #tpu.memory_space<vmem>>, vector<1x8xf32>
    %c0_17 = arith.constant 0 : index
    %c0_18 = arith.constant 0 : index
    %14 = vector.load %arg12[%c0_17, %c0_18] : memref<1x8xf32, #tpu.memory_space<vmem>>, vector<1x8xf32>
    %cst_19 = arith.constant 0.000000e+00 : f32
    %15 = vector.broadcast %cst_19 : f32 to vector<48x128xf32>
    %c7 = arith.constant 7 : index
    %c0_20 = arith.constant 0 : index
    %16 = vector.load %arg1[%c7, %c0_20] : memref<64x128xf32, #tpu.memory_space<vmem>>, vector<48x128xf32>
    %c0_21 = arith.constant 0 : index
    %c0_22 = arith.constant 0 : index
    %c0_23 = arith.constant 0 : index
    %17 = vector.load %arg5[%c0_21, %c0_22, %c0_23] : memref<3x128x128xf32, #tpu.memory_space<vmem>>, vector<1x128x128xf32>
    %18 = vector.shape_cast %17 : vector<1x128x128xf32> to vector<128x128xf32>
    %cst_24 = arith.constant dense<0.000000e+00> : vector<48x128xf32>
    %19 = tpu.matmul %16, %18, %cst_24 {dimension_numbers = #tpu.dot_dimension_numbers<[1], [0], [0], [1], [0, 0, 1, 1], [], []>} : vector<48x128xf32>, vector<128x128xf32>, vector<48x128xf32> -> vector<48x128xf32>
    %20 = arith.addf %15, %19 : vector<48x128xf32>
    %c7_25 = arith.constant 7 : index
    %c0_26 = arith.constant 0 : index
    %21 = vector.load %arg16[%c7_25, %c0_26] : memref<64x128xf32, #tpu.memory_space<vmem>>, vector<48x128xf32>
    %c0_27 = arith.constant 0 : index
    %c0_28 = arith.constant 0 : index
    %c0_29 = arith.constant 0 : index
    %22 = vector.load %arg6[%c0_27, %c0_28, %c0_29] : memref<3x128x128xf32, #tpu.memory_space<vmem>>, vector<1x128x128xf32>
    %23 = vector.shape_cast %22 : vector<1x128x128xf32> to vector<128x128xf32>
    %cst_30 = arith.constant dense<0.000000e+00> : vector<48x128xf32>
    %24 = tpu.matmul %21, %23, %cst_30 {dimension_numbers = #tpu.dot_dimension_numbers<[1], [0], [0], [1], [0, 0, 1, 1], [], []>} : vector<48x128xf32>, vector<128x128xf32>, vector<48x128xf32> -> vector<48x128xf32>
    %25 = arith.addf %20, %24 : vector<48x128xf32>
    %c8 = arith.constant 8 : index
    %c0_31 = arith.constant 0 : index
    %26 = vector.load %arg1[%c8, %c0_31] : memref<64x128xf32, #tpu.memory_space<vmem>>, vector<48x128xf32>
    %c1 = arith.constant 1 : index
    %c0_32 = arith.constant 0 : index
    %c0_33 = arith.constant 0 : index
    %27 = vector.load %arg5[%c1, %c0_32, %c0_33] : memref<3x128x128xf32, #tpu.memory_space<vmem>>, vector<1x128x128xf32>
    %28 = vector.shape_cast %27 : vector<1x128x128xf32> to vector<128x128xf32>
    %cst_34 = arith.constant dense<0.000000e+00> : vector<48x128xf32>
    %29 = tpu.matmul %26, %28, %cst_34 {dimension_numbers = #tpu.dot_dimension_numbers<[1], [0], [0], [1], [0, 0, 1, 1], [], []>} : vector<48x128xf32>, vector<128x128xf32>, vector<48x128xf32> -> vector<48x128xf32>
    %30 = arith.addf %25, %29 : vector<48x128xf32>
    %c8_35 = arith.constant 8 : index
    %c0_36 = arith.constant 0 : index
    %31 = vector.load %arg16[%c8_35, %c0_36] : memref<64x128xf32, #tpu.memory_space<vmem>>, vector<48x128xf32>
    %c1_37 = arith.constant 1 : index
    %c0_38 = arith.constant 0 : index
    %c0_39 = arith.constant 0 : index
    %32 = vector.load %arg6[%c1_37, %c0_38, %c0_39] : memref<3x128x128xf32, #tpu.memory_space<vmem>>, vector<1x128x128xf32>
    %33 = vector.shape_cast %32 : vector<1x128x128xf32> to vector<128x128xf32>
    %cst_40 = arith.constant dense<0.000000e+00> : vector<48x128xf32>
    %34 = tpu.matmul %31, %33, %cst_40 {dimension_numbers = #tpu.dot_dimension_numbers<[1], [0], [0], [1], [0, 0, 1, 1], [], []>} : vector<48x128xf32>, vector<128x128xf32>, vector<48x128xf32> -> vector<48x128xf32>
    %35 = arith.addf %30, %34 : vector<48x128xf32>
    %c9 = arith.constant 9 : index
    %c0_41 = arith.constant 0 : index
    %36 = vector.load %arg1[%c9, %c0_41] : memref<64x128xf32, #tpu.memory_space<vmem>>, vector<48x128xf32>
    %c2 = arith.constant 2 : index
    %c0_42 = arith.constant 0 : index
    %c0_43 = arith.constant 0 : index
    %37 = vector.load %arg5[%c2, %c0_42, %c0_43] : memref<3x128x128xf32, #tpu.memory_space<vmem>>, vector<1x128x128xf32>
    %38 = vector.shape_cast %37 : vector<1x128x128xf32> to vector<128x128xf32>
    %cst_44 = arith.constant dense<0.000000e+00> : vector<48x128xf32>
    %39 = tpu.matmul %36, %38, %cst_44 {dimension_numbers = #tpu.dot_dimension_numbers<[1], [0], [0], [1], [0, 0, 1, 1], [], []>} : vector<48x128xf32>, vector<128x128xf32>, vector<48x128xf32> -> vector<48x128xf32>
    %40 = arith.addf %35, %39 : vector<48x128xf32>
    %c9_45 = arith.constant 9 : index
    %c0_46 = arith.constant 0 : index
    %41 = vector.load %arg16[%c9_45, %c0_46] : memref<64x128xf32, #tpu.memory_space<vmem>>, vector<48x128xf32>
    %c2_47 = arith.constant 2 : index
    %c0_48 = arith.constant 0 : index
    %c0_49 = arith.constant 0 : index
    %42 = vector.load %arg6[%c2_47, %c0_48, %c0_49] : memref<3x128x128xf32, #tpu.memory_space<vmem>>, vector<1x128x128xf32>
    %43 = vector.shape_cast %42 : vector<1x128x128xf32> to vector<128x128xf32>
    %cst_50 = arith.constant dense<0.000000e+00> : vector<48x128xf32>
    %44 = tpu.matmul %41, %43, %cst_50 {dimension_numbers = #tpu.dot_dimension_numbers<[1], [0], [0], [1], [0, 0, 1, 1], [], []>} : vector<48x128xf32>, vector<128x128xf32>, vector<48x128xf32> -> vector<48x128xf32>
    %45 = arith.addf %40, %44 : vector<48x128xf32>
    %46 = vector.broadcast %10 : vector<48x1xf32> to vector<48x128xf32>
    %47 = arith.mulf %45, %46 : vector<48x128xf32>
    %cst_51 = arith.constant dense<0.000000e+00> : vector<128xf32>
    %48 = vector.multi_reduction <add>, %47, %cst_51 [0] : vector<48x128xf32> to vector<128xf32>
    %49 = vector.shape_cast %48 : vector<128xf32> to vector<1x128xf32>
    %50 = arith.mulf %47, %47 : vector<48x128xf32>
    %cst_52 = arith.constant dense<0.000000e+00> : vector<128xf32>
    %51 = vector.multi_reduction <add>, %50, %cst_52 [0] : vector<48x128xf32> to vector<128xf32>
    %52 = vector.shape_cast %51 : vector<128xf32> to vector<1x128xf32>
    %53 = tpu.concatenate %49, %52 in 0 : vector<1x128xf32>, vector<1x128xf32> -> vector<2x128xf32>
    %cst_53 = arith.constant dense<0.000000e+00> : vector<2x8xf32>
    %54 = tpu.matmul %53, %11, %cst_53 {dimension_numbers = #tpu.dot_dimension_numbers<[1], [0], [0], [1], [0, 0, 1, 1], [], []>} : vector<2x128xf32>, vector<128x8xf32>, vector<2x8xf32> -> vector<2x8xf32>
    %cst_54 = arith.constant 0.001953125 : f32
    %55 = vector.broadcast %cst_54 : f32 to vector<2x8xf32>
    %56 = arith.mulf %54, %55 : vector<2x8xf32>
    %57 = vector.extract_strided_slice %56 {offsets = [0, 0], sizes = [1, 8], strides = [1, 1]} : vector<2x8xf32> to vector<1x8xf32>
    %58 = vector.extract_strided_slice %56 {offsets = [1, 0], sizes = [1, 8], strides = [1, 1]} : vector<2x8xf32> to vector<1x8xf32>
    %59 = arith.mulf %57, %57 : vector<1x8xf32>
    %60 = arith.subf %58, %59 : vector<1x8xf32>
    %cst_55 = arith.constant 9.99999974E-6 : f32
    %61 = vector.broadcast %cst_55 : f32 to vector<1x8xf32>
    %62 = arith.addf %60, %61 : vector<1x8xf32>
    %63 = math.rsqrt %62 : vector<1x8xf32>
    %64 = arith.mulf %13, %63 : vector<1x8xf32>
    %65 = arith.mulf %57, %64 : vector<1x8xf32>
    %66 = arith.subf %14, %65 : vector<1x8xf32>
    %67 = tpu.concatenate %64, %66 in 0 : vector<1x8xf32>, vector<1x8xf32> -> vector<2x8xf32>
    %cst_56 = arith.constant dense<0.000000e+00> : vector<2x128xf32>
    %68 = tpu.matmul %67, %12, %cst_56 {dimension_numbers = #tpu.dot_dimension_numbers<[1], [0], [0], [1], [0, 0, 1, 1], [], []>} : vector<2x8xf32>, vector<8x128xf32>, vector<2x128xf32> -> vector<2x128xf32>
    %69 = vector.extract_strided_slice %68 {offsets = [0, 0], sizes = [1, 128], strides = [1, 1]} : vector<2x128xf32> to vector<1x128xf32>
    %70 = vector.broadcast %69 : vector<1x128xf32> to vector<48x128xf32>
    %71 = arith.mulf %45, %70 : vector<48x128xf32>
    %72 = vector.extract_strided_slice %68 {offsets = [1, 0], sizes = [1, 128], strides = [1, 1]} : vector<2x128xf32> to vector<1x128xf32>
    %73 = vector.broadcast %72 : vector<1x128xf32> to vector<48x128xf32>
    %74 = arith.addf %71, %73 : vector<48x128xf32>
    %cst_57 = arith.constant 0.000000e+00 : f32
    %75 = vector.broadcast %cst_57 : f32 to vector<48x128xf32>
    %76 = arith.maximumf %74, %75 : vector<48x128xf32>
    %77 = vector.broadcast %10 : vector<48x1xf32> to vector<48x128xf32>
    %78 = arith.mulf %76, %77 : vector<48x128xf32>
    %cst_58 = arith.constant 0.000000e+00 : f32
    %79 = vector.broadcast %cst_58 : f32 to vector<8x128xf32>
    %c0_59 = arith.constant 0 : index
    %c0_60 = arith.constant 0 : index
    %80 = vector.load %arg17[%c0_59, %c0_60] : memref<64x128xf32, #tpu.memory_space<vmem>>, vector<8x128xf32>
    tpu.vector_store %arg17[%c0_59, %c0_60], %79 {strides = array<i32>} : memref<64x128xf32, #tpu.memory_space<vmem>>, vector<8x128xf32>,
    %cst_61 = arith.constant 0.000000e+00 : f32
    %81 = vector.broadcast %cst_61 : f32 to vector<8x128xf32>
    %c56 = arith.constant 56 : index
    %c0_62 = arith.constant 0 : index
    %82 = vector.load %arg17[%c56, %c0_62] : memref<64x128xf32, #tpu.memory_space<vmem>>, vector<8x128xf32>
    tpu.vector_store %arg17[%c56, %c0_62], %81 {strides = array<i32>} : memref<64x128xf32, #tpu.memory_space<vmem>>, vector<8x128xf32>,
    %c8_63 = arith.constant 8 : index
    %c0_64 = arith.constant 0 : index
    %83 = vector.load %arg17[%c8_63, %c0_64] : memref<64x128xf32, #tpu.memory_space<vmem>>, vector<48x128xf32>
    tpu.vector_store %arg17[%c8_63, %c0_64], %78 {strides = array<i32>} : memref<64x128xf32, #tpu.memory_space<vmem>>, vector<48x128xf32>,
    %c0_65 = arith.constant 0 : index
    %c0_66 = arith.constant 0 : index
    %84 = vector.load %arg13[%c0_65, %c0_66] : memref<1x8xf32, #tpu.memory_space<vmem>>, vector<1x8xf32>
    %c0_67 = arith.constant 0 : index
    %c0_68 = arith.constant 0 : index
    %85 = vector.load %arg14[%c0_67, %c0_68] : memref<1x8xf32, #tpu.memory_space<vmem>>, vector<1x8xf32>
    %cst_69 = arith.constant 0.000000e+00 : f32
    %86 = vector.broadcast %cst_69 : f32 to vector<48x128xf32>
    %c7_70 = arith.constant 7 : index
    %c0_71 = arith.constant 0 : index
    %87 = vector.load %arg17[%c7_70, %c0_71] : memref<64x128xf32, #tpu.memory_space<vmem>>, vector<48x128xf32>
    %c0_72 = arith.constant 0 : index
    %c0_73 = arith.constant 0 : index
    %c0_74 = arith.constant 0 : index
    %88 = vector.load %arg7[%c0_72, %c0_73, %c0_74] : memref<3x128x128xf32, #tpu.memory_space<vmem>>, vector<1x128x128xf32>
    %89 = vector.shape_cast %88 : vector<1x128x128xf32> to vector<128x128xf32>
    %cst_75 = arith.constant dense<0.000000e+00> : vector<48x128xf32>
    %90 = tpu.matmul %87, %89, %cst_75 {dimension_numbers = #tpu.dot_dimension_numbers<[1], [0], [0], [1], [0, 0, 1, 1], [], []>} : vector<48x128xf32>, vector<128x128xf32>, vector<48x128xf32> -> vector<48x128xf32>
    %91 = arith.addf %86, %90 : vector<48x128xf32>
    %c8_76 = arith.constant 8 : index
    %c0_77 = arith.constant 0 : index
    %92 = vector.load %arg17[%c8_76, %c0_77] : memref<64x128xf32, #tpu.memory_space<vmem>>, vector<48x128xf32>
    %c1_78 = arith.constant 1 : index
    %c0_79 = arith.constant 0 : index
    %c0_80 = arith.constant 0 : index
    %93 = vector.load %arg7[%c1_78, %c0_79, %c0_80] : memref<3x128x128xf32, #tpu.memory_space<vmem>>, vector<1x128x128xf32>
    %94 = vector.shape_cast %93 : vector<1x128x128xf32> to vector<128x128xf32>
    %cst_81 = arith.constant dense<0.000000e+00> : vector<48x128xf32>
    %95 = tpu.matmul %92, %94, %cst_81 {dimension_numbers = #tpu.dot_dimension_numbers<[1], [0], [0], [1], [0, 0, 1, 1], [], []>} : vector<48x128xf32>, vector<128x128xf32>, vector<48x128xf32> -> vector<48x128xf32>
    %96 = arith.addf %91, %95 : vector<48x128xf32>
    %c9_82 = arith.constant 9 : index
    %c0_83 = arith.constant 0 : index
    %97 = vector.load %arg17[%c9_82, %c0_83] : memref<64x128xf32, #tpu.memory_space<vmem>>, vector<48x128xf32>
    %c2_84 = arith.constant 2 : index
    %c0_85 = arith.constant 0 : index
    %c0_86 = arith.constant 0 : index
    %98 = vector.load %arg7[%c2_84, %c0_85, %c0_86] : memref<3x128x128xf32, #tpu.memory_space<vmem>>, vector<1x128x128xf32>
    %99 = vector.shape_cast %98 : vector<1x128x128xf32> to vector<128x128xf32>
    %cst_87 = arith.constant dense<0.000000e+00> : vector<48x128xf32>
    %100 = tpu.matmul %97, %99, %cst_87 {dimension_numbers = #tpu.dot_dimension_numbers<[1], [0], [0], [1], [0, 0, 1, 1], [], []>} : vector<48x128xf32>, vector<128x128xf32>, vector<48x128xf32> -> vector<48x128xf32>
    %101 = arith.addf %96, %100 : vector<48x128xf32>
    %102 = vector.broadcast %10 : vector<48x1xf32> to vector<48x128xf32>
    %103 = arith.mulf %101, %102 : vector<48x128xf32>
    %cst_88 = arith.constant dense<0.000000e+00> : vector<128xf32>
    %104 = vector.multi_reduction <add>, %103, %cst_88 [0] : vector<48x128xf32> to vector<128xf32>
    %105 = vector.shape_cast %104 : vector<128xf32> to vector<1x128xf32>
    %106 = arith.mulf %103, %103 : vector<48x128xf32>
    %cst_89 = arith.constant dense<0.000000e+00> : vector<128xf32>
    %107 = vector.multi_reduction <add>, %106, %cst_89 [0] : vector<48x128xf32> to vector<128xf32>
    %108 = vector.shape_cast %107 : vector<128xf32> to vector<1x128xf32>
    %109 = tpu.concatenate %105, %108 in 0 : vector<1x128xf32>, vector<1x128xf32> -> vector<2x128xf32>
    %cst_90 = arith.constant dense<0.000000e+00> : vector<2x8xf32>
    %110 = tpu.matmul %109, %11, %cst_90 {dimension_numbers = #tpu.dot_dimension_numbers<[1], [0], [0], [1], [0, 0, 1, 1], [], []>} : vector<2x128xf32>, vector<128x8xf32>, vector<2x8xf32> -> vector<2x8xf32>
    %cst_91 = arith.constant 0.001953125 : f32
    %111 = vector.broadcast %cst_91 : f32 to vector<2x8xf32>
    %112 = arith.mulf %110, %111 : vector<2x8xf32>
    %113 = vector.extract_strided_slice %112 {offsets = [0, 0], sizes = [1, 8], strides = [1, 1]} : vector<2x8xf32> to vector<1x8xf32>
    %114 = vector.extract_strided_slice %112 {offsets = [1, 0], sizes = [1, 8], strides = [1, 1]} : vector<2x8xf32> to vector<1x8xf32>
    %115 = arith.mulf %113, %113 : vector<1x8xf32>
    %116 = arith.subf %114, %115 : vector<1x8xf32>
    %cst_92 = arith.constant 9.99999974E-6 : f32
    %117 = vector.broadcast %cst_92 : f32 to vector<1x8xf32>
    %118 = arith.addf %116, %117 : vector<1x8xf32>
    %119 = math.rsqrt %118 : vector<1x8xf32>
    %120 = arith.mulf %84, %119 : vector<1x8xf32>
    %121 = arith.mulf %113, %120 : vector<1x8xf32>
    %122 = arith.subf %85, %121 : vector<1x8xf32>
    %123 = tpu.concatenate %120, %122 in 0 : vector<1x8xf32>, vector<1x8xf32> -> vector<2x8xf32>
    %cst_93 = arith.constant dense<0.000000e+00> : vector<2x128xf32>
    %124 = tpu.matmul %123, %12, %cst_93 {dimension_numbers = #tpu.dot_dimension_numbers<[1], [0], [0], [1], [0, 0, 1, 1], [], []>} : vector<2x8xf32>, vector<8x128xf32>, vector<2x128xf32> -> vector<2x128xf32>
    %125 = vector.extract_strided_slice %124 {offsets = [0, 0], sizes = [1, 128], strides = [1, 1]} : vector<2x128xf32> to vector<1x128xf32>
    %126 = vector.broadcast %125 : vector<1x128xf32> to vector<48x128xf32>
    %127 = arith.mulf %101, %126 : vector<48x128xf32>
    %128 = vector.extract_strided_slice %124 {offsets = [1, 0], sizes = [1, 128], strides = [1, 1]} : vector<2x128xf32> to vector<1x128xf32>
    %129 = vector.broadcast %128 : vector<1x128xf32> to vector<48x128xf32>
    %130 = arith.addf %127, %129 : vector<48x128xf32>
    %cst_94 = arith.constant 0.000000e+00 : f32
    %131 = vector.broadcast %cst_94 : f32 to vector<48x128xf32>
    %132 = arith.maximumf %130, %131 : vector<48x128xf32>
    %133 = vector.broadcast %10 : vector<48x1xf32> to vector<48x128xf32>
    %134 = arith.mulf %132, %133 : vector<48x128xf32>
    %135 = vector.extract_strided_slice %134 {offsets = [0, 0], sizes = [16, 128], strides = [1, 1]} : vector<48x128xf32> to vector<16x128xf32>
    %c0_95 = arith.constant 0 : index
    %c0_96 = arith.constant 0 : index
    %136 = vector.load %arg15[%c0_95, %c0_96] : memref<32x128xf32, #tpu.memory_space<vmem>>, vector<16x128xf32>
    tpu.vector_store %arg15[%c0_95, %c0_96], %135 {strides = array<i32>} : memref<32x128xf32, #tpu.memory_space<vmem>>, vector<16x128xf32>,
    %137 = vector.extract_strided_slice %134 {offsets = [24, 0], sizes = [16, 128], strides = [1, 1]} : vector<48x128xf32> to vector<16x128xf32>
    %c16 = arith.constant 16 : index
    %c0_97 = arith.constant 0 : index
    %138 = vector.load %arg15[%c16, %c0_97] : memref<32x128xf32, #tpu.memory_space<vmem>>, vector<16x128xf32>
    tpu.vector_store %arg15[%c16, %c0_97], %137 {strides = array<i32>} : memref<32x128xf32, #tpu.memory_space<vmem>>, vector<16x128xf32>,
    return
  }
}

</mosaic_0001>

<llo_original>
// kernel: tpu_custom_call.1
$region0: #{tpu_custom_call.1}
  #allocation0 [shape = 'u32[]', space=smem, size = 0x4, offset = 0x4, fixed_abs, tag = 'smem constant byte address 0x4 - core index']
  #allocation1 [shape = 'u32[144,128]{1,0:T(1,128)}', space=vmem, size = 0x12000, scoped, tag = 'internal scratch']
  #allocation2 [shape = 'f32[64,128]{1,0:T(8,128)}', space=vmem, size = 0x8000, scoped, tag = 'scratch operand']
  #allocation3 [shape = 'f32[64,128]{1,0:T(8,128)}', space=vmem, size = 0x8000, scoped, tag = 'scratch operand']
  %s0 = inlined_call_operand.vmem [shape: f32[64,256], index: 0, kind: input, shape index: {}]
  %s1 = inlined_call_operand.vmem [shape: f32[64,128], index: 1, kind: input, shape index: {}]
  %s2 = inlined_call_operand.hbm [shape: f32[256,128], index: 2, kind: input, shape index: {}]
  %s3 = inlined_call_operand.vmem [shape: f32[1,128], index: 3, kind: input, shape index: {}]
  %s4 = inlined_call_operand.vmem [shape: f32[64,1], index: 4, kind: input, shape index: {}]
  %s5 = inlined_call_operand.hbm [shape: f32[3,128,128], index: 5, kind: input, shape index: {}]
  %s6 = inlined_call_operand.hbm [shape: f32[3,128,128], index: 6, kind: input, shape index: {}]
  %s7 = inlined_call_operand.hbm [shape: f32[3,128,128], index: 7, kind: input, shape index: {}]
  %s8 = inlined_call_operand.vmem [shape: f32[128,8], index: 8, kind: input, shape index: {}]
  %s9 = inlined_call_operand.vmem [shape: f32[8,128], index: 9, kind: input, shape index: {}]
  %s10 = inlined_call_operand.vmem [shape: f32[48,1], index: 10, kind: input, shape index: {}]
  %s11 = inlined_call_operand.vmem [shape: f32[1,8], index: 11, kind: input, shape index: {}]
  %s12 = inlined_call_operand.vmem [shape: f32[1,8], index: 12, kind: input, shape index: {}]
  %s13 = inlined_call_operand.vmem [shape: f32[1,8], index: 13, kind: input, shape index: {}]
  %s14 = inlined_call_operand.vmem [shape: f32[1,8], index: 14, kind: input, shape index: {}]
  %s15 = inlined_call_operand.hbm [shape: f32[32,128], index: 15, kind: output, shape index: {}]
  %s16 = sld [smem:[#allocation0]]
  $region86: #{tpu_custom_call.1} parent=0
    _
  %s18 = ssub.s32 1, %s16
  %s19 = scalar_select 0, %s18, %s16
  $region1: #{tpu_custom_call.1} parent=0
    #allocation4 [shape = 'u8[131072]{0}', space=vmem, size = 0x20000, scoped, tag = 'input window, operand 2, single buffered']
    #allocation5 [shape = 's32[1]{0}', space=sflag, size = 0x4, scoped, tag = 'scoped memory for tpu_custom_call.1']
    #allocation6 [shape = 's32[1]{0}', space=sflag, size = 0x4, scoped, tag = 'scoped memory for tpu_custom_call.1']
    #allocation7 [shape = 'u8[196608]{0}', space=vmem, size = 0x30000, scoped, tag = 'input window, operand 5, single buffered']
    #allocation8 [shape = 's32[1]{0}', space=sflag, size = 0x4, scoped, tag = 'scoped memory for tpu_custom_call.1']
    #allocation9 [shape = 'u8[196608]{0}', space=vmem, size = 0x30000, scoped, tag = 'input window, operand 6, single buffered']
    #allocation10 [shape = 'u8[196608]{0}', space=vmem, size = 0x30000, scoped, tag = 'input window, operand 7, single buffered']
    #allocation11 [shape = 's32[1]{0}', space=sflag, size = 0x4, scoped, tag = 'scoped memory for tpu_custom_call.1']
    #allocation12 [shape = 'u8[16384]{0}', space=vmem, size = 0x4000, scoped, tag = 'output window, operand 0, single buffered']
    %20 = vsyncpa [#allocation5], 0
    %21 = vsyncpa [#allocation8], 0
    %22 = vsyncpa [#allocation11], 0
    %23 = vsyncpa [#allocation6], 0
    // Predicated region
    $region2: #{tpu_custom_call.1} parent=1 // pred_check
      _
    $region3: #{tpu_custom_call.1} parent=1 // pred_check_branch
      %25 = sbr.rel (0) target = $region5
    $region4: #{tpu_custom_call.1} parent=1 // pred_region
      _
    $region5: #{tpu_custom_call.1} parent=1 // pred_fallthru
      _
    // Predicated region
    $region6: #{tpu_custom_call.1} parent=1 // pred_check
      _
    $region7: #{tpu_custom_call.1} parent=1 // pred_check_branch
      %27 = sbr.rel (0) target = $region9
    $region8: #{tpu_custom_call.1} parent=1 // pred_region
      _
    $region9: #{tpu_custom_call.1} parent=1 // pred_fallthru
      _
    // Predicated region
    $region10: #{tpu_custom_call.1} parent=1 // pred_check
      _
    $region11: #{tpu_custom_call.1} parent=1 // pred_check_branch
      %29 = sbr.rel (0) target = $region13
    $region12: #{tpu_custom_call.1} parent=1 // pred_region
      %s31 = ssub.s32 4096, 4096
      %32 = vsyncadd [#allocation5], %s31
      %s33 = sshll.u32 [#allocation4], 4
      %s34 = int_to_ptr.vmem [resolvable:$true] %s33
      %39 = dma.hbm_to_vmem [thread:$0]  %s2, 4096, %s34, [#allocation5], 128, 128, 8
    $region13: #{tpu_custom_call.1} parent=1 // pred_fallthru
      _
    // Predicated region
    $region14: #{tpu_custom_call.1} parent=1 // pred_check
      _
    $region15: #{tpu_custom_call.1} parent=1 // pred_check_branch
      %41 = sbr.rel (0) target = $region17
    $region16: #{tpu_custom_call.1} parent=1 // pred_region
      _
    $region17: #{tpu_custom_call.1} parent=1 // pred_fallthru
      _
    // Predicated region
    $region18: #{tpu_custom_call.1} parent=1 // pred_check
      _
    $region19: #{tpu_custom_call.1} parent=1 // pred_check_branch
      %43 = sbr.rel (0) target = $region21
    $region20: #{tpu_custom_call.1} parent=1 // pred_region
      _
    $region21: #{tpu_custom_call.1} parent=1 // pred_fallthru
      _
    // Predicated region
    $region22: #{tpu_custom_call.1} parent=1 // pred_check
      _
    $region23: #{tpu_custom_call.1} parent=1 // pred_check_branch
      %45 = sbr.rel (0) target = $region25
    $region24: #{tpu_custom_call.1} parent=1 // pred_region
      %s47 = ssub.s32 6144, 6144
      %48 = vsyncadd [#allocation8], %s47
      %s49 = sshll.u32 [#allocation7], 4
      %s50 = int_to_ptr.vmem [resolvable:$true] %s49
      %55 = dma.hbm_to_vmem [thread:$0]  %s5, 6144, %s50, [#allocation8], 128, 128, 8
    $region25: #{tpu_custom_call.1} parent=1 // pred_fallthru
      _
    // Predicated region
    $region26: #{tpu_custom_call.1} parent=1 // pred_check
      _
    $region27: #{tpu_custom_call.1} parent=1 // pred_check_branch
      %57 = sbr.rel (0) target = $region29
    $region28: #{tpu_custom_call.1} parent=1 // pred_region
      %s59 = ssub.s32 6144, 6144
      %60 = vsyncadd [#allocation8], %s59
      %s61 = sshll.u32 [#allocation9], 4
      %s62 = int_to_ptr.vmem [resolvable:$true] %s61
      %67 = dma.hbm_to_vmem [thread:$0]  %s6, 6144, %s62, [#allocation8], 128, 128, 8
    $region29: #{tpu_custom_call.1} parent=1 // pred_fallthru
      _
    // Predicated region
    $region30: #{tpu_custom_call.1} parent=1 // pred_check
      _
    $region31: #{tpu_custom_call.1} parent=1 // pred_check_branch
      %69 = sbr.rel (0) target = $region33
    $region32: #{tpu_custom_call.1} parent=1 // pred_region
      %s71 = ssub.s32 6144, 6144
      %72 = vsyncadd [#allocation11], %s71
      %s73 = sshll.u32 [#allocation10], 4
      %s74 = int_to_ptr.vmem [resolvable:$true] %s73
      %79 = dma.hbm_to_vmem [thread:$0]  %s7, 6144, %s74, [#allocation11], 128, 128, 8
    $region33: #{tpu_custom_call.1} parent=1 // pred_fallthru
      _
    // Predicated region
    $region34: #{tpu_custom_call.1} parent=1 // pred_check
      _
    $region35: #{tpu_custom_call.1} parent=1 // pred_check_branch
      %81 = sbr.rel (0) target = $region37
    $region36: #{tpu_custom_call.1} parent=1 // pred_region
      _
    $region37: #{tpu_custom_call.1} parent=1 // pred_fallthru
      _
    // Predicated region
    $region38: #{tpu_custom_call.1} parent=1 // pred_check
      _
    $region39: #{tpu_custom_call.1} parent=1 // pred_check_branch
      %83 = sbr.rel (0) target = $region41
    $region40: #{tpu_custom_call.1} parent=1 // pred_region
      _
    $region41: #{tpu_custom_call.1} parent=1 // pred_fallthru
      _
    // Predicated region
    $region42: #{tpu_custom_call.1} parent=1 // pred_check
      _
    $region43: #{tpu_custom_call.1} parent=1 // pred_check_branch
      %85 = sbr.rel (0) target = $region45
    $region44: #{tpu_custom_call.1} parent=1 // pred_region
      _
    $region45: #{tpu_custom_call.1} parent=1 // pred_fallthru
      _
    // Predicated region
    $region46: #{tpu_custom_call.1} parent=1 // pred_check
      _
    $region47: #{tpu_custom_call.1} parent=1 // pred_check_branch
      %87 = sbr.rel (0) target = $region49
    $region48: #{tpu_custom_call.1} parent=1 // pred_region
      _
    $region49: #{tpu_custom_call.1} parent=1 // pred_fallthru
      _
    // Predicated region
    $region50: #{tpu_custom_call.1} parent=1 // pred_check
      _
    $region51: #{tpu_custom_call.1} parent=1 // pred_check_branch
      %89 = sbr.rel (0) target = $region53
    $region52: #{tpu_custom_call.1} parent=1 // pred_region
      _
    $region53: #{tpu_custom_call.1} parent=1 // pred_fallthru
      _
    // Predicated region
    $region54: #{tpu_custom_call.1} parent=1 // pred_check
      _
    $region55: #{tpu_custom_call.1} parent=1 // pred_check_branch
      %91 = sbr.rel (0) target = $region57
    $region56: #{tpu_custom_call.1} parent=1 // pred_region
      _
    $region57: #{tpu_custom_call.1} parent=1 // pred_fallthru
      _
    // Predicated region
    $region58: #{tpu_custom_call.1} parent=1 // pred_check
      _
    $region59: #{tpu_custom_call.1} parent=1 // pred_check_branch
      %93 = sbr.rel (0) target = $region61
    $region60: #{tpu_custom_call.1} parent=1 // pred_region
      _
    $region61: #{tpu_custom_call.1} parent=1 // pred_fallthru
      _
    // Predicated region
    $region62: #{tpu_custom_call.1} parent=1 // pred_check
      _
    $region63: #{tpu_custom_call.1} parent=1 // pred_check_branch
      %95 = sbr.rel (0) target = $region65
    $region64: #{tpu_custom_call.1} parent=1 // pred_region
      %96 = dma.done [#allocation5], 4096
    $region65: #{tpu_custom_call.1} parent=1 // pred_fallthru
      _
    // Predicated region
    $region66: #{tpu_custom_call.1} parent=1 // pred_check
      _
    $region67: #{tpu_custom_call.1} parent=1 // pred_check_branch
      %98 = sbr.rel (0) target = $region69
    $region68: #{tpu_custom_call.1} parent=1 // pred_region
      %99 = dma.done [#allocation8], 6144
    $region69: #{tpu_custom_call.1} parent=1 // pred_fallthru
      _
    // Predicated region
    $region70: #{tpu_custom_call.1} parent=1 // pred_check
      _
    $region71: #{tpu_custom_call.1} parent=1 // pred_check_branch
      %101 = sbr.rel (0) target = $region73
    $region72: #{tpu_custom_call.1} parent=1 // pred_region
      %102 = dma.done [#allocation8], 6144
    $region73: #{tpu_custom_call.1} parent=1 // pred_fallthru
      _
    // Predicated region
    $region74: #{tpu_custom_call.1} parent=1 // pred_check
      _
    $region75: #{tpu_custom_call.1} parent=1 // pred_check_branch
      %104 = sbr.rel (0) target = $region77
    $region76: #{tpu_custom_call.1} parent=1 // pred_region
      %105 = dma.done [#allocation11], 6144
    $region77: #{tpu_custom_call.1} parent=1 // pred_fallthru
      _
    %v106 = vld [vmem:[%s0] sm:$0xff]
    %v107 = vld [vmem:[%s0 + $0x8] sm:$0xff]
    %v108 = vld [vmem:[%s0 + $0x10] sm:$0xff]
    %v109 = vld [vmem:[%s0 + $0x18] sm:$0xff]
    %v110 = vld [vmem:[%s0 + $0x20] sm:$0xff]
    %v111 = vld [vmem:[%s0 + $0x28] sm:$0xff]
    %v112 = vld [vmem:[%s0 + $0x30] sm:$0xff]
    %v113 = vld [vmem:[%s0 + $0x38] sm:$0xff]
    %v114 = vld [vmem:[%s0 + $0x40] sm:$0xff]
    %v115 = vld [vmem:[%s0 + $0x48] sm:$0xff]
    %v116 = vld [vmem:[%s0 + $0x50] sm:$0xff]
    %v117 = vld [vmem:[%s0 + $0x58] sm:$0xff]
    %v118 = vld [vmem:[%s0 + $0x60] sm:$0xff]
    %v119 = vld [vmem:[%s0 + $0x68] sm:$0xff]
    %v120 = vld [vmem:[%s0 + $0x70] sm:$0xff]
    %v121 = vld [vmem:[%s0 + $0x78] sm:$0xff]
    %v122 = vld [vmem:[#allocation4] sm:$0xff]
    %v123 = vld [vmem:[#allocation4 + $0x8] sm:$0xff]
    %v124 = vld [vmem:[#allocation4 + $0x10] sm:$0xff]
    %v125 = vld [vmem:[#allocation4 + $0x18] sm:$0xff]
    %v126 = vld [vmem:[#allocation4 + $0x20] sm:$0xff]
    %v127 = vld [vmem:[#allocation4 + $0x28] sm:$0xff]
    %v128 = vld [vmem:[#allocation4 + $0x30] sm:$0xff]
    %v129 = vld [vmem:[#allocation4 + $0x38] sm:$0xff]
    %v130 = vld [vmem:[#allocation4 + $0x40] sm:$0xff]
    %v131 = vld [vmem:[#allocation4 + $0x48] sm:$0xff]
    %v132 = vld [vmem:[#allocation4 + $0x50] sm:$0xff]
    %v133 = vld [vmem:[#allocation4 + $0x58] sm:$0xff]
    %v134 = vld [vmem:[#allocation4 + $0x60] sm:$0xff]
    %v135 = vld [vmem:[#allocation4 + $0x68] sm:$0xff]
    %v136 = vld [vmem:[#allocation4 + $0x70] sm:$0xff]
    %v137 = vld [vmem:[#allocation4 + $0x78] sm:$0xff]
    %v138 = vld [vmem:[#allocation4 + $0x80] sm:$0xff]
    %v139 = vld [vmem:[#allocation4 + $0x88] sm:$0xff]
    %v140 = vld [vmem:[#allocation4 + $0x90] sm:$0xff]
    %v141 = vld [vmem:[#allocation4 + $0x98] sm:$0xff]
    %v142 = vld [vmem:[#allocation4 + $0xa0] sm:$0xff]
    %v143 = vld [vmem:[#allocation4 + $0xa8] sm:$0xff]
    %v144 = vld [vmem:[#allocation4 + $0xb0] sm:$0xff]
    %v145 = vld [vmem:[#allocation4 + $0xb8] sm:$0xff]
    %v146 = vld [vmem:[#allocation4 + $0xc0] sm:$0xff]
    %v147 = vld [vmem:[#allocation4 + $0xc8] sm:$0xff]
    %v148 = vld [vmem:[#allocation4 + $0xd0] sm:$0xff]
    %v149 = vld [vmem:[#allocation4 + $0xd8] sm:$0xff]
    %v150 = vld [vmem:[#allocation4 + $0xe0] sm:$0xff]
    %v151 = vld [vmem:[#allocation4 + $0xe8] sm:$0xff]
    %v152 = vld [vmem:[#allocation4 + $0xf0] sm:$0xff]
    %v153 = vld [vmem:[#allocation4 + $0xf8] sm:$0xff]
    %v154 = vld [vmem:[%s3] sm:$0x1]
    %v156 = vlaneseq
    %v157 = vshrl.u32 %v156, 7
    %v158 = vsub.s32 0, %v157
    %v159 = vrot.slane %v154, %v158
    %161 = vmatprep.subr.mxu0 0.0
    %162 = vmatpush1.msra.mxu0 %v137
    %163 = vmatprep.subr.mxu0 0.0
    %164 = vmatpush1.msra.mxu0 %v136
    %165 = vmatprep.subr.mxu0 0.0
    %166 = vmatpush1.msra.mxu0 %v135
    %167 = vmatprep.subr.mxu0 0.0
    %168 = vmatpush1.msra.mxu0 %v134
    %169 = vmatprep.subr.mxu0 0.0
    %170 = vmatpush1.msra.mxu0 %v133
    %171 = vmatprep.subr.mxu0 0.0
    %172 = vmatpush1.msra.mxu0 %v132
    %173 = vmatprep.subr.mxu0 0.0
    %174 = vmatpush1.msra.mxu0 %v131
    %175 = vmatprep.subr.mxu0 0.0
    %176 = vmatpush1.msra.mxu0 %v130
    %177 = vmatprep.subr.mxu0 0.0
    %178 = vmatpush1.msra.mxu0 %v129
    %179 = vmatprep.subr.mxu0 0.0
    %180 = vmatpush1.msra.mxu0 %v128
    %181 = vmatprep.subr.mxu0 0.0
    %182 = vmatpush1.msra.mxu0 %v127
    %183 = vmatprep.subr.mxu0 0.0
    %184 = vmatpush1.msra.mxu0 %v126
    %185 = vmatprep.subr.mxu0 0.0
    %186 = vmatpush1.msra.mxu0 %v125
    %187 = vmatprep.subr.mxu0 0.0
    %188 = vmatpush1.msra.mxu0 %v124
    %189 = vmatprep.subr.mxu0 0.0
    %190 = vmatpush1.msra.mxu0 %v123
    %191 = vmatprep.subr.mxu0 0.0
    %192 = vmatpush1.msra.mxu0 %v122
    %193 = vmatprep.subr.mxu0 0.0
    %194 = vmatpush2.msra.mxu0 %v153
    %195 = vmatprep.subr.mxu0 0.0
    %196 = vmatpush2.msra.mxu0 %v152
    %197 = vmatprep.subr.mxu0 0.0
    %198 = vmatpush2.msra.mxu0 %v151
    %199 = vmatprep.subr.mxu0 0.0
    %200 = vmatpush2.msra.mxu0 %v150
    %201 = vmatprep.subr.mxu0 0.0
    %202 = vmatpush2.msra.mxu0 %v149
    %203 = vmatprep.subr.mxu0 0.0
    %204 = vmatpush2.msra.mxu0 %v148
    %205 = vmatprep.subr.mxu0 0.0
    %206 = vmatpush2.msra.mxu0 %v147
    %207 = vmatprep.subr.mxu0 0.0
    %208 = vmatpush2.msra.mxu0 %v146
    %209 = vmatprep.subr.mxu0 0.0
    %210 = vmatpush2.msra.mxu0 %v145
    %211 = vmatprep.subr.mxu0 0.0
    %212 = vmatpush2.msra.mxu0 %v144
    %213 = vmatprep.subr.mxu0 0.0
    %214 = vmatpush2.msra.mxu0 %v143
    %215 = vmatprep.subr.mxu0 0.0
    %216 = vmatpush2.msra.mxu0 %v142
    %217 = vmatprep.subr.mxu0 0.0
    %218 = vmatpush2.msra.mxu0 %v141
    %219 = vmatprep.subr.mxu0 0.0
    %220 = vmatpush2.msra.mxu0 %v140
    %221 = vmatprep.subr.mxu0 0.0
    %222 = vmatpush2.msra.mxu0 %v139
    %223 = vmatprep.subr.mxu0 0.0
    %224 = vmatpush2.msra.mxu0 %v138
    %225 = vmatprep.mubr.f32.mxu0 %v107
    %226 = vmatmul.mubr.f32.gmra.mxu0 %v106
    %v227 = vpop.f32.mrf.mxu0
    %v228 = vadd.f32 %v159, %v227
    %v229 = vpop.f32.mrf.mxu0
    %230 = vmatprep.mubr.f32.mxu0 %v109
    %231 = vmatmul.mubr.f32.gmra.mxu0 %v108
    %v232 = vpop.f32.mrf.mxu0
    %v233 = vadd.f32 %v159, %v232
    %v234 = vpop.f32.mrf.mxu0
    %235 = vmatprep.mubr.f32.mxu0 %v111
    %236 = vmatmul.mubr.f32.gmra.mxu0 %v110
    %v237 = vpop.f32.mrf.mxu0
    %v238 = vadd.f32 %v159, %v237
    %v239 = vpop.f32.mrf.mxu0
    %240 = vmatprep.mubr.f32.mxu0 %v113
    %241 = vmatmul.mubr.f32.gmra.mxu0 %v112
    %v242 = vpop.f32.mrf.mxu0
    %v243 = vadd.f32 %v159, %v242
    %v244 = vpop.f32.mrf.mxu0
    %245 = vmatprep.mubr.f32.mxu0 %v115
    %246 = vmatmul.mubr.f32.gmra.mxu0 %v114
    %v247 = vpop.f32.mrf.mxu0
    %v248 = vadd.f32 %v159, %v247
    %v249 = vpop.f32.mrf.mxu0
    %250 = vmatprep.mubr.f32.mxu0 %v117
    %251 = vmatmul.mubr.f32.gmra.mxu0 %v116
    %v252 = vpop.f32.mrf.mxu0
    %v253 = vadd.f32 %v159, %v252
    %v254 = vpop.f32.mrf.mxu0
    %255 = vmatprep.mubr.f32.mxu0 %v119
    %256 = vmatmul.mubr.f32.gmra.mxu0 %v118
    %v257 = vpop.f32.mrf.mxu0
    %v258 = vadd.f32 %v159, %v257
    %v259 = vpop.f32.mrf.mxu0
    %260 = vmatprep.mubr.f32.mxu0 %v121
    %261 = vmatmul.mubr.f32.gmra.mxu0 %v120
    %v262 = vpop.f32.mrf.mxu0
    %v263 = vadd.f32 %v159, %v262
    %v264 = vpop.f32.mrf.mxu0
    %265 = vdwg.mxu0
    %v266 = vld [vmem:[%s4] sm:$0xff]
    %v267 = vld [vmem:[%s4 + $0x8] sm:$0xff]
    %v268 = vld [vmem:[%s4 + $0x10] sm:$0xff]
    %v269 = vld [vmem:[%s4 + $0x18] sm:$0xff]
    %v270 = vld [vmem:[%s4 + $0x20] sm:$0xff]
    %v271 = vld [vmem:[%s4 + $0x28] sm:$0xff]
    %v272 = vld [vmem:[%s4 + $0x30] sm:$0xff]
    %v273 = vld [vmem:[%s4 + $0x38] sm:$0xff]
    %275 = vset.pattern.permute.xlu0 0
    %276 = vperm.xlu0 %275, %v266
    %v277 = vpop.permute.xlu0 %276
    %280 = vset.pattern.permute.xlu0 0
    %281 = vperm.xlu0 %280, %v267
    %v282 = vpop.permute.xlu0 %281
    %285 = vset.pattern.permute.xlu0 0
    %286 = vperm.xlu0 %285, %v268
    %v287 = vpop.permute.xlu0 %286
    %290 = vset.pattern.permute.xlu0 0
    %291 = vperm.xlu0 %290, %v269
    %v292 = vpop.permute.xlu0 %291
    %295 = vset.pattern.permute.xlu0 0
    %296 = vperm.xlu0 %295, %v270
    %v297 = vpop.permute.xlu0 %296
    %300 = vset.pattern.permute.xlu0 0
    %301 = vperm.xlu0 %300, %v271
    %v302 = vpop.permute.xlu0 %301
    %305 = vset.pattern.permute.xlu0 0
    %306 = vperm.xlu0 %305, %v272
    %v307 = vpop.permute.xlu0 %306
    %310 = vset.pattern.permute.xlu0 0
    %311 = vperm.xlu0 %310, %v273
    %v312 = vpop.permute.xlu0 %311
    %v314 = vmul.f32 %v228, %v277
    %v315 = vmul.f32 %v233, %v282
    %v316 = vmul.f32 %v238, %v287
    %v317 = vmul.f32 %v243, %v292
    %v318 = vmul.f32 %v248, %v297
    %v319 = vmul.f32 %v253, %v302
    %v320 = vmul.f32 %v258, %v307
    %v321 = vmul.f32 %v263, %v312
    %322 = vst [vmem:[#allocation2] sm:$0xff] %v314
    %323 = vst [vmem:[#allocation2 + $0x8] sm:$0xff] %v315
    %324 = vst [vmem:[#allocation2 + $0x10] sm:$0xff] %v316
    %325 = vst [vmem:[#allocation2 + $0x18] sm:$0xff] %v317
    %326 = vst [vmem:[#allocation2 + $0x20] sm:$0xff] %v318
    %327 = vst [vmem:[#allocation2 + $0x28] sm:$0xff] %v319
    %328 = vst [vmem:[#allocation2 + $0x30] sm:$0xff] %v320
    %329 = vst [vmem:[#allocation2 + $0x38] sm:$0xff] %v321
    %v330 = vld [vmem:[%s10] sm:$0xff]
    %v331 = vld [vmem:[%s10 + $0x8] sm:$0xff]
    %v332 = vld [vmem:[%s10 + $0x10] sm:$0xff]
    %v333 = vld [vmem:[%s10 + $0x18] sm:$0xff]
    %v334 = vld [vmem:[%s10 + $0x20] sm:$0xff]
    %v335 = vld [vmem:[%s10 + $0x28] sm:$0xff]
    %v336 = vld [vmem:[%s8] sm:$0xff]
    %v337 = vld [vmem:[%s8 + $0x8] sm:$0xff]
    %v338 = vld [vmem:[%s8 + $0x10] sm:$0xff]
    %v339 = vld [vmem:[%s8 + $0x18] sm:$0xff]
    %v340 = vld [vmem:[%s8 + $0x20] sm:$0xff]
    %v341 = vld [vmem:[%s8 + $0x28] sm:$0xff]
    %v342 = vld [vmem:[%s8 + $0x30] sm:$0xff]
    %v343 = vld [vmem:[%s8 + $0x38] sm:$0xff]
    %v344 = vld [vmem:[%s8 + $0x40] sm:$0xff]
    %v345 = vld [vmem:[%s8 + $0x48] sm:$0xff]
    %v346 = vld [vmem:[%s8 + $0x50] sm:$0xff]
    %v347 = vld [vmem:[%s8 + $0x58] sm:$0xff]
    %v348 = vld [vmem:[%s8 + $0x60] sm:$0xff]
    %v349 = vld [vmem:[%s8 + $0x68] sm:$0xff]
    %v350 = vld [vmem:[%s8 + $0x70] sm:$0xff]
    %v351 = vld [vmem:[%s8 + $0x78] sm:$0xff]
    %v352 = vld [vmem:[%s9] sm:$0xff]
    %v353 = vld [vmem:[%s11] sm:$0x1]
    %v354 = vld [vmem:[%s12] sm:$0x1]
    %v355 = vld [vmem:[%s1 + $0x7] sm:$0xff]
    %v356 = vld [vmem:[%s1 + $0xf] sm:$0xff]
    %v357 = vld [vmem:[%s1 + $0x17] sm:$0xff]
    %v358 = vld [vmem:[%s1 + $0x1f] sm:$0xff]
    %v359 = vld [vmem:[%s1 + $0x27] sm:$0xff]
    %v360 = vld [vmem:[%s1 + $0x2f] sm:$0xff]
    %v361 = vld [vmem:[#allocation7] sm:$0xff]
    %v362 = vld [vmem:[#allocation7 + $0x8] sm:$0xff]
    %v363 = vld [vmem:[#allocation7 + $0x10] sm:$0xff]
    %v364 = vld [vmem:[#allocation7 + $0x18] sm:$0xff]
    %v365 = vld [vmem:[#allocation7 + $0x20] sm:$0xff]
    %v366 = vld [vmem:[#allocation7 + $0x28] sm:$0xff]
    %v367 = vld [vmem:[#allocation7 + $0x30] sm:$0xff]
    %v368 = vld [vmem:[#allocation7 + $0x38] sm:$0xff]
    %v369 = vld [vmem:[#allocation7 + $0x40] sm:$0xff]
    %v370 = vld [vmem:[#allocation7 + $0x48] sm:$0xff]
    %v371 = vld [vmem:[#allocation7 + $0x50] sm:$0xff]
    %v372 = vld [vmem:[#allocation7 + $0x58] sm:$0xff]
    %v373 = vld [vmem:[#allocation7 + $0x60] sm:$0xff]
    %v374 = vld [vmem:[#allocation7 + $0x68] sm:$0xff]
    %v375 = vld [vmem:[#allocation7 + $0x70] sm:$0xff]
    %v376 = vld [vmem:[#allocation7 + $0x78] sm:$0xff]
    %v377 = vld [vmem:[#allocation2 + $0x7] sm:$0xff]
    %v378 = vld [vmem:[#allocation2 + $0xf] sm:$0xff]
    %v379 = vld [vmem:[#allocation2 + $0x17] sm:$0xff]
    %v380 = vld [vmem:[#allocation2 + $0x1f] sm:$0xff]
    %v381 = vld [vmem:[#allocation2 + $0x27] sm:$0xff]
    %v382 = vld [vmem:[#allocation2 + $0x2f] sm:$0xff]
    %v383 = vld [vmem:[#allocation9] sm:$0xff]
    %v384 = vld [vmem:[#allocation9 + $0x8] sm:$0xff]
    %v385 = vld [vmem:[#allocation9 + $0x10] sm:$0xff]
    %v386 = vld [vmem:[#allocation9 + $0x18] sm:$0xff]
    %v387 = vld [vmem:[#allocation9 + $0x20] sm:$0xff]
    %v388 = vld [vmem:[#allocation9 + $0x28] sm:$0xff]
    %v389 = vld [vmem:[#allocation9 + $0x30] sm:$0xff]
    %v390 = vld [vmem:[#allocation9 + $0x38] sm:$0xff]
    %v391 = vld [vmem:[#allocation9 + $0x40] sm:$0xff]
    %v392 = vld [vmem:[#allocation9 + $0x48] sm:$0xff]
    %v393 = vld [vmem:[#allocation9 + $0x50] sm:$0xff]
    %v394 = vld [vmem:[#allocation9 + $0x58] sm:$0xff]
    %v395 = vld [vmem:[#allocation9 + $0x60] sm:$0xff]
    %v396 = vld [vmem:[#allocation9 + $0x68] sm:$0xff]
    %v397 = vld [vmem:[#allocation9 + $0x70] sm:$0xff]
    %v398 = vld [vmem:[#allocation9 + $0x78] sm:$0xff]
    %399 = vmatprep.subr.mxu0 0.0
    %400 = vmatpush1.msra.mxu0 %v398
    %401 = vmatprep.subr.mxu0 0.0
    %402 = vmatpush1.msra.mxu0 %v397
    %403 = vmatprep.subr.mxu0 0.0
    %404 = vmatpush1.msra.mxu0 %v396
    %405 = vmatprep.subr.mxu0 0.0
    %406 = vmatpush1.msra.mxu0 %v395
    %407 = vmatprep.subr.mxu0 0.0
    %408 = vmatpush1.msra.mxu0 %v394
    %409 = vmatprep.subr.mxu0 0.0
    %410 = vmatpush1.msra.mxu0 %v393
    %411 = vmatprep.subr.mxu0 0.0
    %412 = vmatpush1.msra.mxu0 %v392
    %413 = vmatprep.subr.mxu0 0.0
    %414 = vmatpush1.msra.mxu0 %v391
    %415 = vmatprep.subr.mxu0 0.0
    %416 = vmatpush1.msra.mxu0 %v390
    %417 = vmatprep.subr.mxu0 0.0
    %418 = vmatpush1.msra.mxu0 %v389
    %419 = vmatprep.subr.mxu0 0.0
    %420 = vmatpush1.msra.mxu0 %v388
    %421 = vmatprep.subr.mxu0 0.0
    %422 = vmatpush1.msra.mxu0 %v387
    %423 = vmatprep.subr.mxu0 0.0
    %424 = vmatpush1.msra.mxu0 %v386
    %425 = vmatprep.subr.mxu0 0.0
    %426 = vmatpush1.msra.mxu0 %v385
    %427 = vmatprep.subr.mxu0 0.0
    %428 = vmatpush1.msra.mxu0 %v384
    %429 = vmatprep.subr.mxu0 0.0
    %430 = vmatpush1.msra.mxu0 %v383
    %431 = vmatprep.subr.mxu0 0.0
    %432 = vmatpush2.msra.mxu0 0.0
    %433 = vmatprep.subr.mxu0 0.0
    %434 = vmatpush2.msra.mxu0 0.0
    %435 = vmatprep.subr.mxu0 0.0
    %436 = vmatpush2.msra.mxu0 0.0
    %437 = vmatprep.subr.mxu0 0.0
    %438 = vmatpush2.msra.mxu0 0.0
    %439 = vmatprep.subr.mxu0 0.0
    %440 = vmatpush2.msra.mxu0 0.0
    %441 = vmatprep.subr.mxu0 0.0
    %442 = vmatpush2.msra.mxu0 0.0
    %443 = vmatprep.subr.mxu0 0.0
    %444 = vmatpush2.msra.mxu0 0.0
    %445 = vmatprep.subr.mxu0 0.0
    %446 = vmatpush2.msra.mxu0 0.0
    %447 = vmatprep.subr.mxu0 0.0
    %448 = vmatpush2.msra.mxu0 0.0
    %449 = vmatprep.subr.mxu0 0.0
    %450 = vmatpush2.msra.mxu0 0.0
    %451 = vmatprep.subr.mxu0 0.0
    %452 = vmatpush2.msra.mxu0 0.0
    %453 = vmatprep.subr.mxu0 0.0
    %454 = vmatpush2.msra.mxu0 0.0
    %455 = vmatprep.subr.mxu0 0.0
    %456 = vmatpush2.msra.mxu0 0.0
    %457 = vmatprep.subr.mxu0 0.0
    %458 = vmatpush2.msra.mxu0 0.0
    %459 = vmatprep.subr.mxu0 0.0
    %460 = vmatpush2.msra.mxu0 0.0
    %461 = vmatprep.subr.mxu0 0.0
    %462 = vmatpush2.msra.mxu0 0.0
    %463 = vmatprep.mubr.f32.mxu0 0.0
    %464 = vmatmul.mubr.f32.gmra.mxu0 %v377
    %v465 = vpop.f32.mrf.mxu0
    %v466 = vadd.f32 0.0, %v465
    %v467 = vpop.f32.mrf.mxu0
    %468 = vmatprep.mubr.f32.mxu0 0.0
    %469 = vmatmul.mubr.f32.gmra.mxu0 %v378
    %v470 = vpop.f32.mrf.mxu0
    %v471 = vadd.f32 0.0, %v470
    %v472 = vpop.f32.mrf.mxu0
    %473 = vmatprep.mubr.f32.mxu0 0.0
    %474 = vmatmul.mubr.f32.gmra.mxu0 %v379
    %v475 = vpop.f32.mrf.mxu0
    %v476 = vadd.f32 0.0, %v475
    %v477 = vpop.f32.mrf.mxu0
    %478 = vmatprep.mubr.f32.mxu0 0.0
    %479 = vmatmul.mubr.f32.gmra.mxu0 %v380
    %v480 = vpop.f32.mrf.mxu0
    %v481 = vadd.f32 0.0, %v480
    %v482 = vpop.f32.mrf.mxu0
    %483 = vmatprep.mubr.f32.mxu0 0.0
    %484 = vmatmul.mubr.f32.gmra.mxu0 %v381
    %v485 = vpop.f32.mrf.mxu0
    %v486 = vadd.f32 0.0, %v485
    %v487 = vpop.f32.mrf.mxu0
    %488 = vmatprep.mubr.f32.mxu0 0.0
    %489 = vmatmul.mubr.f32.gmra.mxu0 %v382
    %v490 = vpop.f32.mrf.mxu0
    %v491 = vadd.f32 0.0, %v490
    %v492 = vpop.f32.mrf.mxu0
    %493 = vdwg.mxu0
    %494 = vmatprep.subr.mxu0 0.0
    %495 = vmatpush1.msra.mxu0 %v376
    %496 = vmatprep.subr.mxu0 0.0
    %497 = vmatpush1.msra.mxu0 %v375
    %498 = vmatprep.subr.mxu0 0.0
    %499 = vmatpush1.msra.mxu0 %v374
    %500 = vmatprep.subr.mxu0 0.0
    %501 = vmatpush1.msra.mxu0 %v373
    %502 = vmatprep.subr.mxu0 0.0
    %503 = vmatpush1.msra.mxu0 %v372
    %504 = vmatprep.subr.mxu0 0.0
    %505 = vmatpush1.msra.mxu0 %v371
    %506 = vmatprep.subr.mxu0 0.0
    %507 = vmatpush1.msra.mxu0 %v370
    %508 = vmatprep.subr.mxu0 0.0
    %509 = vmatpush1.msra.mxu0 %v369
    %510 = vmatprep.subr.mxu0 0.0
    %511 = vmatpush1.msra.mxu0 %v368
    %512 = vmatprep.subr.mxu0 0.0
    %513 = vmatpush1.msra.mxu0 %v367
    %514 = vmatprep.subr.mxu0 0.0
    %515 = vmatpush1.msra.mxu0 %v366
    %516 = vmatprep.subr.mxu0 0.0
    %517 = vmatpush1.msra.mxu0 %v365
    %518 = vmatprep.subr.mxu0 0.0
    %519 = vmatpush1.msra.mxu0 %v364
    %520 = vmatprep.subr.mxu0 0.0
    %521 = vmatpush1.msra.mxu0 %v363
    %522 = vmatprep.subr.mxu0 0.0
    %523 = vmatpush1.msra.mxu0 %v362
    %524 = vmatprep.subr.mxu0 0.0
    %525 = vmatpush1.msra.mxu0 %v361
    %526 = vmatprep.subr.mxu0 0.0
    %527 = vmatpush2.msra.mxu0 0.0
    %528 = vmatprep.subr.mxu0 0.0
    %529 = vmatpush2.msra.mxu0 0.0
    %530 = vmatprep.subr.mxu0 0.0
    %531 = vmatpush2.msra.mxu0 0.0
    %532 = vmatprep.subr.mxu0 0.0
    %533 = vmatpush2.msra.mxu0 0.0
    %534 = vmatprep.subr.mxu0 0.0
    %535 = vmatpush2.msra.mxu0 0.0
    %536 = vmatprep.subr.mxu0 0.0
    %537 = vmatpush2.msra.mxu0 0.0
    %538 = vmatprep.subr.mxu0 0.0
    %539 = vmatpush2.msra.mxu0 0.0
    %540 = vmatprep.subr.mxu0 0.0
    %541 = vmatpush2.msra.mxu0 0.0
    %542 = vmatprep.subr.mxu0 0.0
    %543 = vmatpush2.msra.mxu0 0.0
    %544 = vmatprep.subr.mxu0 0.0
    %545 = vmatpush2.msra.mxu0 0.0
    %546 = vmatprep.subr.mxu0 0.0
    %547 = vmatpush2.msra.mxu0 0.0
    %548 = vmatprep.subr.mxu0 0.0
    %549 = vmatpush2.msra.mxu0 0.0
    %550 = vmatprep.subr.mxu0 0.0
    %551 = vmatpush2.msra.mxu0 0.0
    %552 = vmatprep.subr.mxu0 0.0
    %553 = vmatpush2.msra.mxu0 0.0
    %554 = vmatprep.subr.mxu0 0.0
    %555 = vmatpush2.msra.mxu0 0.0
    %556 = vmatprep.subr.mxu0 0.0
    %557 = vmatpush2.msra.mxu0 0.0
    %558 = vmatprep.mubr.f32.mxu0 0.0
    %559 = vmatmul.mubr.f32.gmra.mxu0 %v355
    %v560 = vpop.f32.mrf.mxu0
    %v561 = vadd.f32 %v466, %v560
    %v562 = vpop.f32.mrf.mxu0
    %563 = vmatprep.mubr.f32.mxu0 0.0
    %564 = vmatmul.mubr.f32.gmra.mxu0 %v356
    %v565 = vpop.f32.mrf.mxu0
    %v566 = vadd.f32 %v471, %v565
    %v567 = vpop.f32.mrf.mxu0
    %568 = vmatprep.mubr.f32.mxu0 0.0
    %569 = vmatmul.mubr.f32.gmra.mxu0 %v357
    %v570 = vpop.f32.mrf.mxu0
    %v571 = vadd.f32 %v476, %v570
    %v572 = vpop.f32.mrf.mxu0
    %573 = vmatprep.mubr.f32.mxu0 0.0
    %574 = vmatmul.mubr.f32.gmra.mxu0 %v358
    %v575 = vpop.f32.mrf.mxu0
    %v576 = vadd.f32 %v481, %v575
    %v577 = vpop.f32.mrf.mxu0
    %578 = vmatprep.mubr.f32.mxu0 0.0
    %579 = vmatmul.mubr.f32.gmra.mxu0 %v359
    %v580 = vpop.f32.mrf.mxu0
    %v581 = vadd.f32 %v486, %v580
    %v582 = vpop.f32.mrf.mxu0
    %583 = vmatprep.mubr.f32.mxu0 0.0
    %584 = vmatmul.mubr.f32.gmra.mxu0 %v360
    %v585 = vpop.f32.mrf.mxu0
    %v586 = vadd.f32 %v491, %v585
    %v587 = vpop.f32.mrf.mxu0
    %588 = vdwg.mxu0
    %v589 = vld [vmem:[%s1 + $0x8] sm:$0xff]
    %v590 = vld [vmem:[%s1 + $0x10] sm:$0xff]
    %v591 = vld [vmem:[%s1 + $0x18] sm:$0xff]
    %v592 = vld [vmem:[%s1 + $0x20] sm:$0xff]
    %v593 = vld [vmem:[%s1 + $0x28] sm:$0xff]
    %v594 = vld [vmem:[%s1 + $0x30] sm:$0xff]
    %s595 = scalar_lea.vmem [#allocation7], 128
    %v596 = vld [vmem:[%s595] sm:$0xff]
    %v597 = vld [vmem:[%s595 + $0x8] sm:$0xff]
    %v598 = vld [vmem:[%s595 + $0x10] sm:$0xff]
    %v599 = vld [vmem:[%s595 + $0x18] sm:$0xff]
    %v600 = vld [vmem:[%s595 + $0x20] sm:$0xff]
    %v601 = vld [vmem:[%s595 + $0x28] sm:$0xff]
    %v602 = vld [vmem:[%s595 + $0x30] sm:$0xff]
    %v603 = vld [vmem:[%s595 + $0x38] sm:$0xff]
    %v604 = vld [vmem:[%s595 + $0x40] sm:$0xff]
    %v605 = vld [vmem:[%s595 + $0x48] sm:$0xff]
    %v606 = vld [vmem:[%s595 + $0x50] sm:$0xff]
    %v607 = vld [vmem:[%s595 + $0x58] sm:$0xff]
    %v608 = vld [vmem:[%s595 + $0x60] sm:$0xff]
    %v609 = vld [vmem:[%s595 + $0x68] sm:$0xff]
    %v610 = vld [vmem:[%s595 + $0x70] sm:$0xff]
    %v611 = vld [vmem:[%s595 + $0x78] sm:$0xff]
    %612 = vmatprep.subr.mxu0 0.0
    %613 = vmatpush1.msra.mxu0 %v611
    %614 = vmatprep.subr.mxu0 0.0
    %615 = vmatpush1.msra.mxu0 %v610
    %616 = vmatprep.subr.mxu0 0.0
    %617 = vmatpush1.msra.mxu0 %v609
    %618 = vmatprep.subr.mxu0 0.0
    %619 = vmatpush1.msra.mxu0 %v608
    %620 = vmatprep.subr.mxu0 0.0
    %621 = vmatpush1.msra.mxu0 %v607
    %622 = vmatprep.subr.mxu0 0.0
    %623 = vmatpush1.msra.mxu0 %v606
    %624 = vmatprep.subr.mxu0 0.0
    %625 = vmatpush1.msra.mxu0 %v605
    %626 = vmatprep.subr.mxu0 0.0
    %627 = vmatpush1.msra.mxu0 %v604
    %628 = vmatprep.subr.mxu0 0.0
    %629 = vmatpush1.msra.mxu0 %v603
    %630 = vmatprep.subr.mxu0 0.0
    %631 = vmatpush1.msra.mxu0 %v602
    %632 = vmatprep.subr.mxu0 0.0
    %633 = vmatpush1.msra.mxu0 %v601
    %634 = vmatprep.subr.mxu0 0.0
    %635 = vmatpush1.msra.mxu0 %v600
    %636 = vmatprep.subr.mxu0 0.0
    %637 = vmatpush1.msra.mxu0 %v599
    %638 = vmatprep.subr.mxu0 0.0
    %639 = vmatpush1.msra.mxu0 %v598
    %640 = vmatprep.subr.mxu0 0.0
    %641 = vmatpush1.msra.mxu0 %v597
    %642 = vmatprep.subr.mxu0 0.0
    %643 = vmatpush1.msra.mxu0 %v596
    %644 = vmatprep.subr.mxu0 0.0
    %645 = vmatpush2.msra.mxu0 0.0
    %646 = vmatprep.subr.mxu0 0.0
    %647 = vmatpush2.msra.mxu0 0.0
    %648 = vmatprep.subr.mxu0 0.0
    %649 = vmatpush2.msra.mxu0 0.0
    %650 = vmatprep.subr.mxu0 0.0
    %651 = vmatpush2.msra.mxu0 0.0
    %652 = vmatprep.subr.mxu0 0.0
    %653 = vmatpush2.msra.mxu0 0.0
    %654 = vmatprep.subr.mxu0 0.0
    %655 = vmatpush2.msra.mxu0 0.0
    %656 = vmatprep.subr.mxu0 0.0
    %657 = vmatpush2.msra.mxu0 0.0
    %658 = vmatprep.subr.mxu0 0.0
    %659 = vmatpush2.msra.mxu0 0.0
    %660 = vmatprep.subr.mxu0 0.0
    %661 = vmatpush2.msra.mxu0 0.0
    %662 = vmatprep.subr.mxu0 0.0
    %663 = vmatpush2.msra.mxu0 0.0
    %664 = vmatprep.subr.mxu0 0.0
    %665 = vmatpush2.msra.mxu0 0.0
    %666 = vmatprep.subr.mxu0 0.0
    %667 = vmatpush2.msra.mxu0 0.0
    %668 = vmatprep.subr.mxu0 0.0
    %669 = vmatpush2.msra.mxu0 0.0
    %670 = vmatprep.subr.mxu0 0.0
    %671 = vmatpush2.msra.mxu0 0.0
    %672 = vmatprep.subr.mxu0 0.0
    %673 = vmatpush2.msra.mxu0 0.0
    %674 = vmatprep.subr.mxu0 0.0
    %675 = vmatpush2.msra.mxu0 0.0
    %676 = vmatprep.mubr.f32.mxu0 0.0
    %677 = vmatmul.mubr.f32.gmra.mxu0 %v589
    %v678 = vpop.f32.mrf.mxu0
    %v679 = vadd.f32 0.0, %v678
    %v680 = vpop.f32.mrf.mxu0
    %681 = vmatprep.mubr.f32.mxu0 0.0
    %682 = vmatmul.mubr.f32.gmra.mxu0 %v590
    %v683 = vpop.f32.mrf.mxu0
    %v684 = vadd.f32 0.0, %v683
    %v685 = vpop.f32.mrf.mxu0
    %686 = vmatprep.mubr.f32.mxu0 0.0
    %687 = vmatmul.mubr.f32.gmra.mxu0 %v591
    %v688 = vpop.f32.mrf.mxu0
    %v689 = vadd.f32 0.0, %v688
    %v690 = vpop.f32.mrf.mxu0
    %691 = vmatprep.mubr.f32.mxu0 0.0
    %692 = vmatmul.mubr.f32.gmra.mxu0 %v592
    %v693 = vpop.f32.mrf.mxu0
    %v694 = vadd.f32 0.0, %v693
    %v695 = vpop.f32.mrf.mxu0
    %696 = vmatprep.mubr.f32.mxu0 0.0
    %697 = vmatmul.mubr.f32.gmra.mxu0 %v593
    %v698 = vpop.f32.mrf.mxu0
    %v699 = vadd.f32 0.0, %v698
    %v700 = vpop.f32.mrf.mxu0
    %701 = vmatprep.mubr.f32.mxu0 0.0
    %702 = vmatmul.mubr.f32.gmra.mxu0 %v594
    %v703 = vpop.f32.mrf.mxu0
    %v704 = vadd.f32 0.0, %v703
    %v705 = vpop.f32.mrf.mxu0
    %706 = vdwg.mxu0
    %v707 = vadd.f32 %v561, %v679
    %v708 = vadd.f32 %v566, %v684
    %v709 = vadd.f32 %v571, %v689
    %v710 = vadd.f32 %v576, %v694
    %v711 = vadd.f32 %v581, %v699
    %v712 = vadd.f32 %v586, %v704
    %v713 = vld [vmem:[#allocation2 + $0x8] sm:$0xff]
    %v714 = vld [vmem:[#allocation2 + $0x10] sm:$0xff]
    %v715 = vld [vmem:[#allocation2 + $0x18] sm:$0xff]
    %v716 = vld [vmem:[#allocation2 + $0x20] sm:$0xff]
    %v717 = vld [vmem:[#allocation2 + $0x28] sm:$0xff]
    %v718 = vld [vmem:[#allocation2 + $0x30] sm:$0xff]
    %s719 = scalar_lea.vmem [#allocation9], 128
    %v720 = vld [vmem:[%s719] sm:$0xff]
    %v721 = vld [vmem:[%s719 + $0x8] sm:$0xff]
    %v722 = vld [vmem:[%s719 + $0x10] sm:$0xff]
    %v723 = vld [vmem:[%s719 + $0x18] sm:$0xff]
    %v724 = vld [vmem:[%s719 + $0x20] sm:$0xff]
    %v725 = vld [vmem:[%s719 + $0x28] sm:$0xff]
    %v726 = vld [vmem:[%s719 + $0x30] sm:$0xff]
    %v727 = vld [vmem:[%s719 + $0x38] sm:$0xff]
    %v728 = vld [vmem:[%s719 + $0x40] sm:$0xff]
    %v729 = vld [vmem:[%s719 + $0x48] sm:$0xff]
    %v730 = vld [vmem:[%s719 + $0x50] sm:$0xff]
    %v731 = vld [vmem:[%s719 + $0x58] sm:$0xff]
    %v732 = vld [vmem:[%s719 + $0x60] sm:$0xff]
    %v733 = vld [vmem:[%s719 + $0x68] sm:$0xff]
    %v734 = vld [vmem:[%s719 + $0x70] sm:$0xff]
    %v735 = vld [vmem:[%s719 + $0x78] sm:$0xff]
    %736 = vmatprep.subr.mxu0 0.0
    %737 = vmatpush1.msra.mxu0 %v735
    %738 = vmatprep.subr.mxu0 0.0
    %739 = vmatpush1.msra.mxu0 %v734
    %740 = vmatprep.subr.mxu0 0.0
    %741 = vmatpush1.msra.mxu0 %v733
    %742 = vmatprep.subr.mxu0 0.0
    %743 = vmatpush1.msra.mxu0 %v732
    %744 = vmatprep.subr.mxu0 0.0
    %745 = vmatpush1.msra.mxu0 %v731
    %746 = vmatprep.subr.mxu0 0.0
    %747 = vmatpush1.msra.mxu0 %v730
    %748 = vmatprep.subr.mxu0 0.0
    %749 = vmatpush1.msra.mxu0 %v729
    %750 = vmatprep.subr.mxu0 0.0
    %751 = vmatpush1.msra.mxu0 %v728
    %752 = vmatprep.subr.mxu0 0.0
    %753 = vmatpush1.msra.mxu0 %v727
    %754 = vmatprep.subr.mxu0 0.0
    %755 = vmatpush1.msra.mxu0 %v726
    %756 = vmatprep.subr.mxu0 0.0
    %757 = vmatpush1.msra.mxu0 %v725
    %758 = vmatprep.subr.mxu0 0.0
    %759 = vmatpush1.msra.mxu0 %v724
    %760 = vmatprep.subr.mxu0 0.0
    %761 = vmatpush1.msra.mxu0 %v723
    %762 = vmatprep.subr.mxu0 0.0
    %763 = vmatpush1.msra.mxu0 %v722
    %764 = vmatprep.subr.mxu0 0.0
    %765 = vmatpush1.msra.mxu0 %v721
    %766 = vmatprep.subr.mxu0 0.0
    %767 = vmatpush1.msra.mxu0 %v720
    %768 = vmatprep.subr.mxu0 0.0
    %769 = vmatpush2.msra.mxu0 0.0
    %770 = vmatprep.subr.mxu0 0.0
    %771 = vmatpush2.msra.mxu0 0.0
    %772 = vmatprep.subr.mxu0 0.0
    %773 = vmatpush2.msra.mxu0 0.0
    %774 = vmatprep.subr.mxu0 0.0
    %775 = vmatpush2.msra.mxu0 0.0
    %776 = vmatprep.subr.mxu0 0.0
    %777 = vmatpush2.msra.mxu0 0.0
    %778 = vmatprep.subr.mxu0 0.0
    %779 = vmatpush2.msra.mxu0 0.0
    %780 = vmatprep.subr.mxu0 0.0
    %781 = vmatpush2.msra.mxu0 0.0
    %782 = vmatprep.subr.mxu0 0.0
    %783 = vmatpush2.msra.mxu0 0.0
    %784 = vmatprep.subr.mxu0 0.0
    %785 = vmatpush2.msra.mxu0 0.0
    %786 = vmatprep.subr.mxu0 0.0
    %787 = vmatpush2.msra.mxu0 0.0
    %788 = vmatprep.subr.mxu0 0.0
    %789 = vmatpush2.msra.mxu0 0.0
    %790 = vmatprep.subr.mxu0 0.0
    %791 = vmatpush2.msra.mxu0 0.0
    %792 = vmatprep.subr.mxu0 0.0
    %793 = vmatpush2.msra.mxu0 0.0
    %794 = vmatprep.subr.mxu0 0.0
    %795 = vmatpush2.msra.mxu0 0.0
    %796 = vmatprep.subr.mxu0 0.0
    %797 = vmatpush2.msra.mxu0 0.0
    %798 = vmatprep.subr.mxu0 0.0
    %799 = vmatpush2.msra.mxu0 0.0
    %800 = vmatprep.mubr.f32.mxu0 0.0
    %801 = vmatmul.mubr.f32.gmra.mxu0 %v713
    %v802 = vpop.f32.mrf.mxu0
    %v803 = vadd.f32 0.0, %v802
    %v804 = vpop.f32.mrf.mxu0
    %805 = vmatprep.mubr.f32.mxu0 0.0
    %806 = vmatmul.mubr.f32.gmra.mxu0 %v714
    %v807 = vpop.f32.mrf.mxu0
    %v808 = vadd.f32 0.0, %v807
    %v809 = vpop.f32.mrf.mxu0
    %810 = vmatprep.mubr.f32.mxu0 0.0
    %811 = vmatmul.mubr.f32.gmra.mxu0 %v715
    %v812 = vpop.f32.mrf.mxu0
    %v813 = vadd.f32 0.0, %v812
    %v814 = vpop.f32.mrf.mxu0
    %815 = vmatprep.mubr.f32.mxu0 0.0
    %816 = vmatmul.mubr.f32.gmra.mxu0 %v716
    %v817 = vpop.f32.mrf.mxu0
    %v818 = vadd.f32 0.0, %v817
    %v819 = vpop.f32.mrf.mxu0
    %820 = vmatprep.mubr.f32.mxu0 0.0
    %821 = vmatmul.mubr.f32.gmra.mxu0 %v717
    %v822 = vpop.f32.mrf.mxu0
    %v823 = vadd.f32 0.0, %v822
    %v824 = vpop.f32.mrf.mxu0
    %825 = vmatprep.mubr.f32.mxu0 0.0
    %826 = vmatmul.mubr.f32.gmra.mxu0 %v718
    %v827 = vpop.f32.mrf.mxu0
    %v828 = vadd.f32 0.0, %v827
    %v829 = vpop.f32.mrf.mxu0
    %830 = vdwg.mxu0
    %v831 = vadd.f32 %v707, %v803
    %v832 = vadd.f32 %v708, %v808
    %v833 = vadd.f32 %v709, %v813
    %v834 = vadd.f32 %v710, %v818
    %v835 = vadd.f32 %v711, %v823
    %v836 = vadd.f32 %v712, %v828
    %v837 = vld [vmem:[%s1 + $0x9] sm:$0xff]
    %v838 = vld [vmem:[%s1 + $0x11] sm:$0xff]
    %v839 = vld [vmem:[%s1 + $0x19] sm:$0xff]
    %v840 = vld [vmem:[%s1 + $0x21] sm:$0xff]
    %v841 = vld [vmem:[%s1 + $0x29] sm:$0xff]
    %v842 = vld [vmem:[%s1 + $0x31] sm:$0xff]
    %s843 = scalar_lea.vmem [#allocation7], 256
    %v844 = vld [vmem:[%s843] sm:$0xff]
    %v845 = vld [vmem:[%s843 + $0x8] sm:$0xff]
    %v846 = vld [vmem:[%s843 + $0x10] sm:$0xff]
    %v847 = vld [vmem:[%s843 + $0x18] sm:$0xff]
    %v848 = vld [vmem:[%s843 + $0x20] sm:$0xff]
    %v849 = vld [vmem:[%s843 + $0x28] sm:$0xff]
    %v850 = vld [vmem:[%s843 + $0x30] sm:$0xff]
    %v851 = vld [vmem:[%s843 + $0x38] sm:$0xff]
    %v852 = vld [vmem:[%s843 + $0x40] sm:$0xff]
    %v853 = vld [vmem:[%s843 + $0x48] sm:$0xff]
    %v854 = vld [vmem:[%s843 + $0x50] sm:$0xff]
    %v855 = vld [vmem:[%s843 + $0x58] sm:$0xff]
    %v856 = vld [vmem:[%s843 + $0x60] sm:$0xff]
    %v857 = vld [vmem:[%s843 + $0x68] sm:$0xff]
    %v858 = vld [vmem:[%s843 + $0x70] sm:$0xff]
    %v859 = vld [vmem:[%s843 + $0x78] sm:$0xff]
    %860 = vmatprep.subr.mxu0 0.0
    %861 = vmatpush1.msra.mxu0 %v859
    %862 = vmatprep.subr.mxu0 0.0
    %863 = vmatpush1.msra.mxu0 %v858
    %864 = vmatprep.subr.mxu0 0.0
    %865 = vmatpush1.msra.mxu0 %v857
    %866 = vmatprep.subr.mxu0 0.0
    %867 = vmatpush1.msra.mxu0 %v856
    %868 = vmatprep.subr.mxu0 0.0
    %869 = vmatpush1.msra.mxu0 %v855
    %870 = vmatprep.subr.mxu0 0.0
    %871 = vmatpush1.msra.mxu0 %v854
    %872 = vmatprep.subr.mxu0 0.0
    %873 = vmatpush1.msra.mxu0 %v853
    %874 = vmatprep.subr.mxu0 0.0
    %875 = vmatpush1.msra.mxu0 %v852
    %876 = vmatprep.subr.mxu0 0.0
    %877 = vmatpush1.msra.mxu0 %v851
    %878 = vmatprep.subr.mxu0 0.0
    %879 = vmatpush1.msra.mxu0 %v850
    %880 = vmatprep.subr.mxu0 0.0
    %881 = vmatpush1.msra.mxu0 %v849
    %882 = vmatprep.subr.mxu0 0.0
    %883 = vmatpush1.msra.mxu0 %v848
    %884 = vmatprep.subr.mxu0 0.0
    %885 = vmatpush1.msra.mxu0 %v847
    %886 = vmatprep.subr.mxu0 0.0
    %887 = vmatpush1.msra.mxu0 %v846
    %888 = vmatprep.subr.mxu0 0.0
    %889 = vmatpush1.msra.mxu0 %v845
    %890 = vmatprep.subr.mxu0 0.0
    %891 = vmatpush1.msra.mxu0 %v844
    %892 = vmatprep.subr.mxu0 0.0
    %893 = vmatpush2.msra.mxu0 0.0
    %894 = vmatprep.subr.mxu0 0.0
    %895 = vmatpush2.msra.mxu0 0.0
    %896 = vmatprep.subr.mxu0 0.0
    %897 = vmatpush2.msra.mxu0 0.0
    %898 = vmatprep.subr.mxu0 0.0
    %899 = vmatpush2.msra.mxu0 0.0
    %900 = vmatprep.subr.mxu0 0.0
    %901 = vmatpush2.msra.mxu0 0.0
    %902 = vmatprep.subr.mxu0 0.0
    %903 = vmatpush2.msra.mxu0 0.0
    %904 = vmatprep.subr.mxu0 0.0
    %905 = vmatpush2.msra.mxu0 0.0
    %906 = vmatprep.subr.mxu0 0.0
    %907 = vmatpush2.msra.mxu0 0.0
    %908 = vmatprep.subr.mxu0 0.0
    %909 = vmatpush2.msra.mxu0 0.0
    %910 = vmatprep.subr.mxu0 0.0
    %911 = vmatpush2.msra.mxu0 0.0
    %912 = vmatprep.subr.mxu0 0.0
    %913 = vmatpush2.msra.mxu0 0.0
    %914 = vmatprep.subr.mxu0 0.0
    %915 = vmatpush2.msra.mxu0 0.0
    %916 = vmatprep.subr.mxu0 0.0
    %917 = vmatpush2.msra.mxu0 0.0
    %918 = vmatprep.subr.mxu0 0.0
    %919 = vmatpush2.msra.mxu0 0.0
    %920 = vmatprep.subr.mxu0 0.0
    %921 = vmatpush2.msra.mxu0 0.0
    %922 = vmatprep.subr.mxu0 0.0
    %923 = vmatpush2.msra.mxu0 0.0
    %924 = vmatprep.mubr.f32.mxu0 0.0
    %925 = vmatmul.mubr.f32.gmra.mxu0 %v837
    %v926 = vpop.f32.mrf.mxu0
    %v927 = vadd.f32 0.0, %v926
    %v928 = vpop.f32.mrf.mxu0
    %929 = vmatprep.mubr.f32.mxu0 0.0
    %930 = vmatmul.mubr.f32.gmra.mxu0 %v838
    %v931 = vpop.f32.mrf.mxu0
    %v932 = vadd.f32 0.0, %v931
    %v933 = vpop.f32.mrf.mxu0
    %934 = vmatprep.mubr.f32.mxu0 0.0
    %935 = vmatmul.mubr.f32.gmra.mxu0 %v839
    %v936 = vpop.f32.mrf.mxu0
    %v937 = vadd.f32 0.0, %v936
    %v938 = vpop.f32.mrf.mxu0
    %939 = vmatprep.mubr.f32.mxu0 0.0
    %940 = vmatmul.mubr.f32.gmra.mxu0 %v840
    %v941 = vpop.f32.mrf.mxu0
    %v942 = vadd.f32 0.0, %v941
    %v943 = vpop.f32.mrf.mxu0
    %944 = vmatprep.mubr.f32.mxu0 0.0
    %945 = vmatmul.mubr.f32.gmra.mxu0 %v841
    %v946 = vpop.f32.mrf.mxu0
    %v947 = vadd.f32 0.0, %v946
    %v948 = vpop.f32.mrf.mxu0
    %949 = vmatprep.mubr.f32.mxu0 0.0
    %950 = vmatmul.mubr.f32.gmra.mxu0 %v842
    %v951 = vpop.f32.mrf.mxu0
    %v952 = vadd.f32 0.0, %v951
    %v953 = vpop.f32.mrf.mxu0
    %954 = vdwg.mxu0
    %v955 = vadd.f32 %v831, %v927
    %v956 = vadd.f32 %v832, %v932
    %v957 = vadd.f32 %v833, %v937
    %v958 = vadd.f32 %v834, %v942
    %v959 = vadd.f32 %v835, %v947
    %v960 = vadd.f32 %v836, %v952
    %v961 = vld [vmem:[#allocation2 + $0x9] sm:$0xff]
    %v962 = vld [vmem:[#allocation2 + $0x11] sm:$0xff]
    %v963 = vld [vmem:[#allocation2 + $0x19] sm:$0xff]
    %v964 = vld [vmem:[#allocation2 + $0x21] sm:$0xff]
    %v965 = vld [vmem:[#allocation2 + $0x29] sm:$0xff]
    %v966 = vld [vmem:[#allocation2 + $0x31] sm:$0xff]
    %s967 = scalar_lea.vmem [#allocation9], 256
    %v968 = vld [vmem:[%s967] sm:$0xff]
    %v969 = vld [vmem:[%s967 + $0x8] sm:$0xff]
    %v970 = vld [vmem:[%s967 + $0x10] sm:$0xff]
    %v971 = vld [vmem:[%s967 + $0x18] sm:$0xff]
    %v972 = vld [vmem:[%s967 + $0x20] sm:$0xff]
    %v973 = vld [vmem:[%s967 + $0x28] sm:$0xff]
    %v974 = vld [vmem:[%s967 + $0x30] sm:$0xff]
    %v975 = vld [vmem:[%s967 + $0x38] sm:$0xff]
    %v976 = vld [vmem:[%s967 + $0x40] sm:$0xff]
    %v977 = vld [vmem:[%s967 + $0x48] sm:$0xff]
    %v978 = vld [vmem:[%s967 + $0x50] sm:$0xff]
    %v979 = vld [vmem:[%s967 + $0x58] sm:$0xff]
    %v980 = vld [vmem:[%s967 + $0x60] sm:$0xff]
    %v981 = vld [vmem:[%s967 + $0x68] sm:$0xff]
    %v982 = vld [vmem:[%s967 + $0x70] sm:$0xff]
    %v983 = vld [vmem:[%s967 + $0x78] sm:$0xff]
    %984 = vmatprep.subr.mxu0 0.0
    %985 = vmatpush1.msra.mxu0 %v983
    %986 = vmatprep.subr.mxu0 0.0
    %987 = vmatpush1.msra.mxu0 %v982
    %988 = vmatprep.subr.mxu0 0.0
    %989 = vmatpush1.msra.mxu0 %v981
    %990 = vmatprep.subr.mxu0 0.0
    %991 = vmatpush1.msra.mxu0 %v980
    %992 = vmatprep.subr.mxu0 0.0
    %993 = vmatpush1.msra.mxu0 %v979
    %994 = vmatprep.subr.mxu0 0.0
    %995 = vmatpush1.msra.mxu0 %v978
    %996 = vmatprep.subr.mxu0 0.0
    %997 = vmatpush1.msra.mxu0 %v977
    %998 = vmatprep.subr.mxu0 0.0
    %999 = vmatpush1.msra.mxu0 %v976
    %1000 = vmatprep.subr.mxu0 0.0
    %1001 = vmatpush1.msra.mxu0 %v975
    %1002 = vmatprep.subr.mxu0 0.0
    %1003 = vmatpush1.msra.mxu0 %v974
    %1004 = vmatprep.subr.mxu0 0.0
    %1005 = vmatpush1.msra.mxu0 %v973
    %1006 = vmatprep.subr.mxu0 0.0
    %1007 = vmatpush1.msra.mxu0 %v972
    %1008 = vmatprep.subr.mxu0 0.0
    %1009 = vmatpush1.msra.mxu0 %v971
    %1010 = vmatprep.subr.mxu0 0.0
    %1011 = vmatpush1.msra.mxu0 %v970
    %1012 = vmatprep.subr.mxu0 0.0
    %1013 = vmatpush1.msra.mxu0 %v969
    %1014 = vmatprep.subr.mxu0 0.0
    %1015 = vmatpush1.msra.mxu0 %v968
    %1016 = vmatprep.subr.mxu0 0.0
    %1017 = vmatpush2.msra.mxu0 0.0
    %1018 = vmatprep.subr.mxu0 0.0
    %1019 = vmatpush2.msra.mxu0 0.0
    %1020 = vmatprep.subr.mxu0 0.0
    %1021 = vmatpush2.msra.mxu0 0.0
    %1022 = vmatprep.subr.mxu0 0.0
    %1023 = vmatpush2.msra.mxu0 0.0
    %1024 = vmatprep.subr.mxu0 0.0
    %1025 = vmatpush2.msra.mxu0 0.0
    %1026 = vmatprep.subr.mxu0 0.0
    %1027 = vmatpush2.msra.mxu0 0.0
    %1028 = vmatprep.subr.mxu0 0.0
    %1029 = vmatpush2.msra.mxu0 0.0
    %1030 = vmatprep.subr.mxu0 0.0
    %1031 = vmatpush2.msra.mxu0 0.0
    %1032 = vmatprep.subr.mxu0 0.0
    %1033 = vmatpush2.msra.mxu0 0.0
    %1034 = vmatprep.subr.mxu0 0.0
    %1035 = vmatpush2.msra.mxu0 0.0
    %1036 = vmatprep.subr.mxu0 0.0
    %1037 = vmatpush2.msra.mxu0 0.0
    %1038 = vmatprep.subr.mxu0 0.0
    %1039 = vmatpush2.msra.mxu0 0.0
    %1040 = vmatprep.subr.mxu0 0.0
    %1041 = vmatpush2.msra.mxu0 0.0
    %1042 = vmatprep.subr.mxu0 0.0
    %1043 = vmatpush2.msra.mxu0 0.0
    %1044 = vmatprep.subr.mxu0 0.0
    %1045 = vmatpush2.msra.mxu0 0.0
    %1046 = vmatprep.subr.mxu0 0.0
    %1047 = vmatpush2.msra.mxu0 0.0
    %1048 = vmatprep.mubr.f32.mxu0 0.0
    %1049 = vmatmul.mubr.f32.gmra.mxu0 %v961
    %v1050 = vpop.f32.mrf.mxu0
    %v1051 = vadd.f32 0.0, %v1050
    %v1052 = vpop.f32.mrf.mxu0
    %1053 = vmatprep.mubr.f32.mxu0 0.0
    %1054 = vmatmul.mubr.f32.gmra.mxu0 %v962
    %v1055 = vpop.f32.mrf.mxu0
    %v1056 = vadd.f32 0.0, %v1055
    %v1057 = vpop.f32.mrf.mxu0
    %1058 = vmatprep.mubr.f32.mxu0 0.0
    %1059 = vmatmul.mubr.f32.gmra.mxu0 %v963
    %v1060 = vpop.f32.mrf.mxu0
    %v1061 = vadd.f32 0.0, %v1060
    %v1062 = vpop.f32.mrf.mxu0
    %1063 = vmatprep.mubr.f32.mxu0 0.0
    %1064 = vmatmul.mubr.f32.gmra.mxu0 %v964
    %v1065 = vpop.f32.mrf.mxu0
    %v1066 = vadd.f32 0.0, %v1065
    %v1067 = vpop.f32.mrf.mxu0
    %1068 = vmatprep.mubr.f32.mxu0 0.0
    %1069 = vmatmul.mubr.f32.gmra.mxu0 %v965
    %v1070 = vpop.f32.mrf.mxu0
    %v1071 = vadd.f32 0.0, %v1070
    %v1072 = vpop.f32.mrf.mxu0
    %1073 = vmatprep.mubr.f32.mxu0 0.0
    %1074 = vmatmul.mubr.f32.gmra.mxu0 %v966
    %v1075 = vpop.f32.mrf.mxu0
    %v1076 = vadd.f32 0.0, %v1075
    %v1077 = vpop.f32.mrf.mxu0
    %1078 = vdwg.mxu0
    %v1079 = vadd.f32 %v955, %v1051
    %v1080 = vadd.f32 %v956, %v1056
    %v1081 = vadd.f32 %v957, %v1061
    %v1082 = vadd.f32 %v958, %v1066
    %v1083 = vadd.f32 %v959, %v1071
    %v1084 = vadd.f32 %v960, %v1076
    %1086 = vset.pattern.permute.xlu0 0
    %1087 = vperm.xlu0 %1086, %v330
    %v1088 = vpop.permute.xlu0 %1087
    %1091 = vset.pattern.permute.xlu0 0
    %1092 = vperm.xlu0 %1091, %v331
    %v1093 = vpop.permute.xlu0 %1092
    %1096 = vset.pattern.permute.xlu0 0
    %1097 = vperm.xlu0 %1096, %v332
    %v1098 = vpop.permute.xlu0 %1097
    %1101 = vset.pattern.permute.xlu0 0
    %1102 = vperm.xlu0 %1101, %v333
    %v1103 = vpop.permute.xlu0 %1102
    %1106 = vset.pattern.permute.xlu0 0
    %1107 = vperm.xlu0 %1106, %v334
    %v1108 = vpop.permute.xlu0 %1107
    %1111 = vset.pattern.permute.xlu0 0
    %1112 = vperm.xlu0 %1111, %v335
    %v1113 = vpop.permute.xlu0 %1112
    %v1115 = vmul.f32 %v1079, %v1088
    %v1116 = vmul.f32 %v1080, %v1093
    %v1117 = vmul.f32 %v1081, %v1098
    %v1118 = vmul.f32 %v1082, %v1103
    %v1119 = vmul.f32 %v1083, %v1108
    %v1120 = vmul.f32 %v1084, %v1113
    %v1121 = vadd.f32 %v1115, %v1116
    %v1122 = vadd.f32 %v1121, %v1117
    %v1123 = vadd.f32 %v1122, %v1118
    %v1124 = vadd.f32 %v1123, %v1119
    %v1125 = vadd.f32 %v1124, %v1120
    %v1126 = vrot.slane %v1125, 4
    %v1127 = vadd.f32 %v1125, %v1126
    %v1128 = vrot.slane %v1127, 2
    %v1129 = vadd.f32 %v1127, %v1128
    %v1130 = vrot.slane %v1129, 1
    %v1131 = vadd.f32 %v1129, %v1130
    %v1132 = vmul.f32 %v1115, %v1115
    %v1133 = vmul.f32 %v1116, %v1116
    %v1134 = vmul.f32 %v1117, %v1117
    %v1135 = vmul.f32 %v1118, %v1118
    %v1136 = vmul.f32 %v1119, %v1119
    %v1137 = vmul.f32 %v1120, %v1120
    %v1138 = vadd.f32 %v1132, %v1133
    %v1139 = vadd.f32 %v1138, %v1134
    %v1140 = vadd.f32 %v1139, %v1135
    %v1141 = vadd.f32 %v1140, %v1136
    %v1142 = vadd.f32 %v1141, %v1137
    %v1143 = vrot.slane %v1142, 4
    %v1144 = vadd.f32 %v1142, %v1143
    %v1145 = vrot.slane %v1144, 2
    %v1146 = vadd.f32 %v1144, %v1145
    %v1147 = vrot.slane %v1146, 1
    %v1148 = vadd.f32 %v1146, %v1147
    %vm1149 = vcmask 1040384
    %v1150 = vsel %vm1149, %v1131, %v1148
    %1151 = vmatprep.subr.mxu0 0.0
    %1152 = vmatpush1.msra.mxu0 %v351
    %1153 = vmatprep.subr.mxu0 0.0
    %1154 = vmatpush1.msra.mxu0 %v350
    %1155 = vmatprep.subr.mxu0 0.0
    %1156 = vmatpush1.msra.mxu0 %v349
    %1157 = vmatprep.subr.mxu0 0.0
    %1158 = vmatpush1.msra.mxu0 %v348
    %1159 = vmatprep.subr.mxu0 0.0
    %1160 = vmatpush1.msra.mxu0 %v347
    %1161 = vmatprep.subr.mxu0 0.0
    %1162 = vmatpush1.msra.mxu0 %v346
    %1163 = vmatprep.subr.mxu0 0.0
    %1164 = vmatpush1.msra.mxu0 %v345
    %1165 = vmatprep.subr.mxu0 0.0
    %1166 = vmatpush1.msra.mxu0 %v344
    %1167 = vmatprep.subr.mxu0 0.0
    %1168 = vmatpush1.msra.mxu0 %v343
    %1169 = vmatprep.subr.mxu0 0.0
    %1170 = vmatpush1.msra.mxu0 %v342
    %1171 = vmatprep.subr.mxu0 0.0
    %1172 = vmatpush1.msra.mxu0 %v341
    %1173 = vmatprep.subr.mxu0 0.0
    %1174 = vmatpush1.msra.mxu0 %v340
    %1175 = vmatprep.subr.mxu0 0.0
    %1176 = vmatpush1.msra.mxu0 %v339
    %1177 = vmatprep.subr.mxu0 0.0
    %1178 = vmatpush1.msra.mxu0 %v338
    %1179 = vmatprep.subr.mxu0 0.0
    %1180 = vmatpush1.msra.mxu0 %v337
    %1181 = vmatprep.subr.mxu0 0.0
    %1182 = vmatpush1.msra.mxu0 %v336
    %1183 = vmatprep.subr.mxu0 0.0
    %1184 = vmatpush2.msra.mxu0 0.0
    %1185 = vmatprep.subr.mxu0 0.0
    %1186 = vmatpush2.msra.mxu0 0.0
    %1187 = vmatprep.subr.mxu0 0.0
    %1188 = vmatpush2.msra.mxu0 0.0
    %1189 = vmatprep.subr.mxu0 0.0
    %1190 = vmatpush2.msra.mxu0 0.0
    %1191 = vmatprep.subr.mxu0 0.0
    %1192 = vmatpush2.msra.mxu0 0.0
    %1193 = vmatprep.subr.mxu0 0.0
    %1194 = vmatpush2.msra.mxu0 0.0
    %1195 = vmatprep.subr.mxu0 0.0
    %1196 = vmatpush2.msra.mxu0 0.0
    %1197 = vmatprep.subr.mxu0 0.0
    %1198 = vmatpush2.msra.mxu0 0.0
    %1199 = vmatprep.subr.mxu0 0.0
    %1200 = vmatpush2.msra.mxu0 0.0
    %1201 = vmatprep.subr.mxu0 0.0
    %1202 = vmatpush2.msra.mxu0 0.0
    %1203 = vmatprep.subr.mxu0 0.0
    %1204 = vmatpush2.msra.mxu0 0.0
    %1205 = vmatprep.subr.mxu0 0.0
    %1206 = vmatpush2.msra.mxu0 0.0
    %1207 = vmatprep.subr.mxu0 0.0
    %1208 = vmatpush2.msra.mxu0 0.0
    %1209 = vmatprep.subr.mxu0 0.0
    %1210 = vmatpush2.msra.mxu0 0.0
    %1211 = vmatprep.subr.mxu0 0.0
    %1212 = vmatpush2.msra.mxu0 0.0
    %1213 = vmatprep.subr.mxu0 0.0
    %1214 = vmatpush2.msra.mxu0 0.0
    %1215 = vmatprep.mubr.f32.mxu0 0.0
    %1216 = vmatmul.mubr.f32.gmra.mxu0 %v1150
    %v1217 = vpop.f32.mrf.mxu0
    %v1218 = vadd.f32 0.0, %v1217
    %v1219 = vpop.f32.mrf.mxu0
    %1220 = vdwg.mxu0
    %v1221 = vmul.f32 %v1218, 0.001953125
    %v1222 = vmul.f32 %v1221, %v1221
    %v1224 = vrot.slane %v1222, 7
    %v1226 = vsub.f32 %v1221, %v1224
    %v1227 = vadd.f32 %v1226, 1e-05
    %v1228 = vrsqrt.pop %v1227
    %v1231 = vunpack.c.l.s4 1966171168
    %v1232 = vunpack.c.0.s8 %v1231
    %v1233 = vlaneseq
    %v1234 = vshrl.u32 %v1233, 7
    %v1235 = vsub.s32 %v1232, %v1234
    %v1236 = vrot.slane %v1228, %v1235
    %v1237 = vcombine.high %v1236, %v1236
    %v1239 = vunpack.c.l.s4 1966171168
    %v1240 = vunpack.c.0.s8 %v1239
    %v1241 = vlaneseq
    %v1242 = vshrl.u32 %v1241, 7
    %v1243 = vsub.s32 %v1240, %v1242
    %v1244 = vrot.slane %v1237, %v1243
    %v1246 = vmul.f32 %v353, %v1244
    %v1247 = vmul.f32 %v1221, %v1246
    %v1248 = vsub.f32 %v354, %v1247
    %v1250 = vlaneseq
    %v1251 = vshrl.u32 %v1250, 7
    %v1252 = vsub.s32 0, %v1251
    %v1253 = vrot.slane %v1248, %v1252
    %v1255 = vsel %vm1149, %v1246, %v1253
    %vm1256 = vcmask 64512
    %v1258 = vsel %vm1256, %v1255, 0
    %1260 = vmatprep.subr.mxu0 0.0
    %1261 = vmatpush1.msra.mxu0 0.0
    %1262 = vmatprep.subr.mxu0 0.0
    %1263 = vmatpush1.msra.mxu0 0.0
    %1264 = vmatprep.subr.mxu0 0.0
    %1265 = vmatpush1.msra.mxu0 0.0
    %1266 = vmatprep.subr.mxu0 0.0
    %1267 = vmatpush1.msra.mxu0 0.0
    %1268 = vmatprep.subr.mxu0 0.0
    %1269 = vmatpush1.msra.mxu0 0.0
    %1270 = vmatprep.subr.mxu0 0.0
    %1271 = vmatpush1.msra.mxu0 0.0
    %1272 = vmatprep.subr.mxu0 0.0
    %1273 = vmatpush1.msra.mxu0 0.0
    %1274 = vmatprep.subr.mxu0 0.0
    %1275 = vmatpush1.msra.mxu0 0.0
    %1276 = vmatprep.subr.mxu0 0.0
    %1277 = vmatpush1.msra.mxu0 0.0
    %1278 = vmatprep.subr.mxu0 0.0
    %1279 = vmatpush1.msra.mxu0 0.0
    %1280 = vmatprep.subr.mxu0 0.0
    %1281 = vmatpush1.msra.mxu0 0.0
    %1282 = vmatprep.subr.mxu0 0.0
    %1283 = vmatpush1.msra.mxu0 0.0
    %1284 = vmatprep.subr.mxu0 0.0
    %1285 = vmatpush1.msra.mxu0 0.0
    %1286 = vmatprep.subr.mxu0 0.0
    %1287 = vmatpush1.msra.mxu0 0.0
    %1288 = vmatprep.subr.mxu0 0.0
    %1289 = vmatpush1.msra.mxu0 0.0
    %1290 = vmatprep.subr.mxu0 0.0
    %1291 = vmatpush1.msra.mxu0 %v352
    %1292 = vmatprep.subr.mxu0 0.0
    %1293 = vmatpush2.msra.mxu0 0.0
    %1294 = vmatprep.subr.mxu0 0.0
    %1295 = vmatpush2.msra.mxu0 0.0
    %1296 = vmatprep.subr.mxu0 0.0
    %1297 = vmatpush2.msra.mxu0 0.0
    %1298 = vmatprep.subr.mxu0 0.0
    %1299 = vmatpush2.msra.mxu0 0.0
    %1300 = vmatprep.subr.mxu0 0.0
    %1301 = vmatpush2.msra.mxu0 0.0
    %1302 = vmatprep.subr.mxu0 0.0
    %1303 = vmatpush2.msra.mxu0 0.0
    %1304 = vmatprep.subr.mxu0 0.0
    %1305 = vmatpush2.msra.mxu0 0.0
    %1306 = vmatprep.subr.mxu0 0.0
    %1307 = vmatpush2.msra.mxu0 0.0
    %1308 = vmatprep.subr.mxu0 0.0
    %1309 = vmatpush2.msra.mxu0 0.0
    %1310 = vmatprep.subr.mxu0 0.0
    %1311 = vmatpush2.msra.mxu0 0.0
    %1312 = vmatprep.subr.mxu0 0.0
    %1313 = vmatpush2.msra.mxu0 0.0
    %1314 = vmatprep.subr.mxu0 0.0
    %1315 = vmatpush2.msra.mxu0 0.0
    %1316 = vmatprep.subr.mxu0 0.0
    %1317 = vmatpush2.msra.mxu0 0.0
    %1318 = vmatprep.subr.mxu0 0.0
    %1319 = vmatpush2.msra.mxu0 0.0
    %1320 = vmatprep.subr.mxu0 0.0
    %1321 = vmatpush2.msra.mxu0 0.0
    %1322 = vmatprep.subr.mxu0 0.0
    %1323 = vmatpush2.msra.mxu0 0.0
    %1324 = vmatprep.mubr.f32.mxu0 0.0
    %1325 = vmatmul.mubr.f32.gmra.mxu0 %v1258
    %v1326 = vpop.f32.mrf.mxu0
    %v1327 = vadd.f32 0.0, %v1326
    %v1328 = vpop.f32.mrf.mxu0
    %1329 = vdwg.mxu0
    %v1330 = vlaneseq
    %v1331 = vshrl.u32 %v1330, 7
    %v1332 = vsub.s32 0, %v1331
    %v1333 = vrot.slane %v1327, %v1332
    %v1334 = vmul.f32 %v1079, %v1333
    %v1335 = vmul.f32 %v1080, %v1333
    %v1336 = vmul.f32 %v1081, %v1333
    %v1337 = vmul.f32 %v1082, %v1333
    %v1338 = vmul.f32 %v1083, %v1333
    %v1339 = vmul.f32 %v1084, %v1333
    %v1340 = vlaneseq
    %v1341 = vshrl.u32 %v1340, 7
    %v1342 = vsub.s32 1, %v1341
    %v1343 = vrot.slane %v1327, %v1342
    %v1344 = vadd.f32 %v1334, %v1343
    %v1345 = vadd.f32 %v1335, %v1343
    %v1346 = vadd.f32 %v1336, %v1343
    %v1347 = vadd.f32 %v1337, %v1343
    %v1348 = vadd.f32 %v1338, %v1343
    %v1349 = vadd.f32 %v1339, %v1343
    %v1350 = vmax.f32 %v1344, 0.0
    %v1351 = vmax.f32 %v1345, 0.0
    %v1352 = vmax.f32 %v1346, 0.0
    %v1353 = vmax.f32 %v1347, 0.0
    %v1354 = vmax.f32 %v1348, 0.0
    %v1355 = vmax.f32 %v1349, 0.0
    %v1356 = vmul.f32 %v1350, %v1088
    %v1357 = vmul.f32 %v1351, %v1093
    %v1358 = vmul.f32 %v1352, %v1098
    %v1359 = vmul.f32 %v1353, %v1103
    %v1360 = vmul.f32 %v1354, %v1108
    %v1361 = vmul.f32 %v1355, %v1113
    %1362 = vst [vmem:[#allocation3] sm:$0xff] 0.0
    %1363 = vst [vmem:[#allocation3 + $0x38] sm:$0xff] 0.0
    %1364 = vst [vmem:[#allocation3 + $0x8] sm:$0xff] %v1356
    %1365 = vst [vmem:[#allocation3 + $0x10] sm:$0xff] %v1357
    %1366 = vst [vmem:[#allocation3 + $0x18] sm:$0xff] %v1358
    %1367 = vst [vmem:[#allocation3 + $0x20] sm:$0xff] %v1359
    %1368 = vst [vmem:[#allocation3 + $0x28] sm:$0xff] %v1360
    %1369 = vst [vmem:[#allocation3 + $0x30] sm:$0xff] %v1361
    %v1370 = vld [vmem:[%s13] sm:$0x1]
    %v1371 = vld [vmem:[%s14] sm:$0x1]
    %v1372 = vld [vmem:[#allocation3 + $0x7] sm:$0xff]
    %v1373 = vld [vmem:[#allocation3 + $0xf] sm:$0xff]
    %v1374 = vld [vmem:[#allocation3 + $0x17] sm:$0xff]
    %v1375 = vld [vmem:[#allocation3 + $0x1f] sm:$0xff]
    %v1376 = vld [vmem:[#allocation3 + $0x27] sm:$0xff]
    %v1377 = vld [vmem:[#allocation3 + $0x2f] sm:$0xff]
    %v1378 = vld [vmem:[#allocation10] sm:$0xff]
    %v1379 = vld [vmem:[#allocation10 + $0x8] sm:$0xff]
    %v1380 = vld [vmem:[#allocation10 + $0x10] sm:$0xff]
    %v1381 = vld [vmem:[#allocation10 + $0x18] sm:$0xff]
    %v1382 = vld [vmem:[#allocation10 + $0x20] sm:$0xff]
    %v1383 = vld [vmem:[#allocation10 + $0x28] sm:$0xff]
    %v1384 = vld [vmem:[#allocation10 + $0x30] sm:$0xff]
    %v1385 = vld [vmem:[#allocation10 + $0x38] sm:$0xff]
    %v1386 = vld [vmem:[#allocation10 + $0x40] sm:$0xff]
    %v1387 = vld [vmem:[#allocation10 + $0x48] sm:$0xff]
    %v1388 = vld [vmem:[#allocation10 + $0x50] sm:$0xff]
    %v1389 = vld [vmem:[#allocation10 + $0x58] sm:$0xff]
    %v1390 = vld [vmem:[#allocation10 + $0x60] sm:$0xff]
    %v1391 = vld [vmem:[#allocation10 + $0x68] sm:$0xff]
    %v1392 = vld [vmem:[#allocation10 + $0x70] sm:$0xff]
    %v1393 = vld [vmem:[#allocation10 + $0x78] sm:$0xff]
    %v1394 = vld [vmem:[#allocation3 + $0x8] sm:$0xff]
    %v1395 = vld [vmem:[#allocation3 + $0x10] sm:$0xff]
    %v1396 = vld [vmem:[#allocation3 + $0x18] sm:$0xff]
    %v1397 = vld [vmem:[#allocation3 + $0x20] sm:$0xff]
    %v1398 = vld [vmem:[#allocation3 + $0x28] sm:$0xff]
    %v1399 = vld [vmem:[#allocation3 + $0x30] sm:$0xff]
    %s1400 = scalar_lea.vmem [#allocation10], 128
    %v1401 = vld [vmem:[%s1400] sm:$0xff]
    %v1402 = vld [vmem:[%s1400 + $0x8] sm:$0xff]
    %v1403 = vld [vmem:[%s1400 + $0x10] sm:$0xff]
    %v1404 = vld [vmem:[%s1400 + $0x18] sm:$0xff]
    %v1405 = vld [vmem:[%s1400 + $0x20] sm:$0xff]
    %v1406 = vld [vmem:[%s1400 + $0x28] sm:$0xff]
    %v1407 = vld [vmem:[%s1400 + $0x30] sm:$0xff]
    %v1408 = vld [vmem:[%s1400 + $0x38] sm:$0xff]
    %v1409 = vld [vmem:[%s1400 + $0x40] sm:$0xff]
    %v1410 = vld [vmem:[%s1400 + $0x48] sm:$0xff]
    %v1411 = vld [vmem:[%s1400 + $0x50] sm:$0xff]
    %v1412 = vld [vmem:[%s1400 + $0x58] sm:$0xff]
    %v1413 = vld [vmem:[%s1400 + $0x60] sm:$0xff]
    %v1414 = vld [vmem:[%s1400 + $0x68] sm:$0xff]
    %v1415 = vld [vmem:[%s1400 + $0x70] sm:$0xff]
    %v1416 = vld [vmem:[%s1400 + $0x78] sm:$0xff]
    %1417 = vmatprep.subr.mxu0 0.0
    %1418 = vmatpush1.msra.mxu0 %v1416
    %1419 = vmatprep.subr.mxu0 0.0
    %1420 = vmatpush1.msra.mxu0 %v1415
    %1421 = vmatprep.subr.mxu0 0.0
    %1422 = vmatpush1.msra.mxu0 %v1414
    %1423 = vmatprep.subr.mxu0 0.0
    %1424 = vmatpush1.msra.mxu0 %v1413
    %1425 = vmatprep.subr.mxu0 0.0
    %1426 = vmatpush1.msra.mxu0 %v1412
    %1427 = vmatprep.subr.mxu0 0.0
    %1428 = vmatpush1.msra.mxu0 %v1411
    %1429 = vmatprep.subr.mxu0 0.0
    %1430 = vmatpush1.msra.mxu0 %v1410
    %1431 = vmatprep.subr.mxu0 0.0
    %1432 = vmatpush1.msra.mxu0 %v1409
    %1433 = vmatprep.subr.mxu0 0.0
    %1434 = vmatpush1.msra.mxu0 %v1408
    %1435 = vmatprep.subr.mxu0 0.0
    %1436 = vmatpush1.msra.mxu0 %v1407
    %1437 = vmatprep.subr.mxu0 0.0
    %1438 = vmatpush1.msra.mxu0 %v1406
    %1439 = vmatprep.subr.mxu0 0.0
    %1440 = vmatpush1.msra.mxu0 %v1405
    %1441 = vmatprep.subr.mxu0 0.0
    %1442 = vmatpush1.msra.mxu0 %v1404
    %1443 = vmatprep.subr.mxu0 0.0
    %1444 = vmatpush1.msra.mxu0 %v1403
    %1445 = vmatprep.subr.mxu0 0.0
    %1446 = vmatpush1.msra.mxu0 %v1402
    %1447 = vmatprep.subr.mxu0 0.0
    %1448 = vmatpush1.msra.mxu0 %v1401
    %1449 = vmatprep.subr.mxu0 0.0
    %1450 = vmatpush2.msra.mxu0 0.0
    %1451 = vmatprep.subr.mxu0 0.0
    %1452 = vmatpush2.msra.mxu0 0.0
    %1453 = vmatprep.subr.mxu0 0.0
    %1454 = vmatpush2.msra.mxu0 0.0
    %1455 = vmatprep.subr.mxu0 0.0
    %1456 = vmatpush2.msra.mxu0 0.0
    %1457 = vmatprep.subr.mxu0 0.0
    %1458 = vmatpush2.msra.mxu0 0.0
    %1459 = vmatprep.subr.mxu0 0.0
    %1460 = vmatpush2.msra.mxu0 0.0
    %1461 = vmatprep.subr.mxu0 0.0
    %1462 = vmatpush2.msra.mxu0 0.0
    %1463 = vmatprep.subr.mxu0 0.0
    %1464 = vmatpush2.msra.mxu0 0.0
    %1465 = vmatprep.subr.mxu0 0.0
    %1466 = vmatpush2.msra.mxu0 0.0
    %1467 = vmatprep.subr.mxu0 0.0
    %1468 = vmatpush2.msra.mxu0 0.0
    %1469 = vmatprep.subr.mxu0 0.0
    %1470 = vmatpush2.msra.mxu0 0.0
    %1471 = vmatprep.subr.mxu0 0.0
    %1472 = vmatpush2.msra.mxu0 0.0
    %1473 = vmatprep.subr.mxu0 0.0
    %1474 = vmatpush2.msra.mxu0 0.0
    %1475 = vmatprep.subr.mxu0 0.0
    %1476 = vmatpush2.msra.mxu0 0.0
    %1477 = vmatprep.subr.mxu0 0.0
    %1478 = vmatpush2.msra.mxu0 0.0
    %1479 = vmatprep.subr.mxu0 0.0
    %1480 = vmatpush2.msra.mxu0 0.0
    %1481 = vmatprep.mubr.f32.mxu0 0.0
    %1482 = vmatmul.mubr.f32.gmra.mxu0 %v1394
    %v1483 = vpop.f32.mrf.mxu0
    %v1484 = vadd.f32 0.0, %v1483
    %v1485 = vpop.f32.mrf.mxu0
    %1486 = vmatprep.mubr.f32.mxu0 0.0
    %1487 = vmatmul.mubr.f32.gmra.mxu0 %v1395
    %v1488 = vpop.f32.mrf.mxu0
    %v1489 = vadd.f32 0.0, %v1488
    %v1490 = vpop.f32.mrf.mxu0
    %1491 = vmatprep.mubr.f32.mxu0 0.0
    %1492 = vmatmul.mubr.f32.gmra.mxu0 %v1396
    %v1493 = vpop.f32.mrf.mxu0
    %v1494 = vadd.f32 0.0, %v1493
    %v1495 = vpop.f32.mrf.mxu0
    %1496 = vmatprep.mubr.f32.mxu0 0.0
    %1497 = vmatmul.mubr.f32.gmra.mxu0 %v1397
    %v1498 = vpop.f32.mrf.mxu0
    %v1499 = vadd.f32 0.0, %v1498
    %v1500 = vpop.f32.mrf.mxu0
    %1501 = vmatprep.mubr.f32.mxu0 0.0
    %1502 = vmatmul.mubr.f32.gmra.mxu0 %v1398
    %v1503 = vpop.f32.mrf.mxu0
    %v1504 = vadd.f32 0.0, %v1503
    %v1505 = vpop.f32.mrf.mxu0
    %1506 = vmatprep.mubr.f32.mxu0 0.0
    %1507 = vmatmul.mubr.f32.gmra.mxu0 %v1399
    %v1508 = vpop.f32.mrf.mxu0
    %v1509 = vadd.f32 0.0, %v1508
    %v1510 = vpop.f32.mrf.mxu0
    %1511 = vdwg.mxu0
    %1512 = vmatprep.subr.mxu0 0.0
    %1513 = vmatpush1.msra.mxu0 %v1393
    %1514 = vmatprep.subr.mxu0 0.0
    %1515 = vmatpush1.msra.mxu0 %v1392
    %1516 = vmatprep.subr.mxu0 0.0
    %1517 = vmatpush1.msra.mxu0 %v1391
    %1518 = vmatprep.subr.mxu0 0.0
    %1519 = vmatpush1.msra.mxu0 %v1390
    %1520 = vmatprep.subr.mxu0 0.0
    %1521 = vmatpush1.msra.mxu0 %v1389
    %1522 = vmatprep.subr.mxu0 0.0
    %1523 = vmatpush1.msra.mxu0 %v1388
    %1524 = vmatprep.subr.mxu0 0.0
    %1525 = vmatpush1.msra.mxu0 %v1387
    %1526 = vmatprep.subr.mxu0 0.0
    %1527 = vmatpush1.msra.mxu0 %v1386
    %1528 = vmatprep.subr.mxu0 0.0
    %1529 = vmatpush1.msra.mxu0 %v1385
    %1530 = vmatprep.subr.mxu0 0.0
    %1531 = vmatpush1.msra.mxu0 %v1384
    %1532 = vmatprep.subr.mxu0 0.0
    %1533 = vmatpush1.msra.mxu0 %v1383
    %1534 = vmatprep.subr.mxu0 0.0
    %1535 = vmatpush1.msra.mxu0 %v1382
    %1536 = vmatprep.subr.mxu0 0.0
    %1537 = vmatpush1.msra.mxu0 %v1381
    %1538 = vmatprep.subr.mxu0 0.0
    %1539 = vmatpush1.msra.mxu0 %v1380
    %1540 = vmatprep.subr.mxu0 0.0
    %1541 = vmatpush1.msra.mxu0 %v1379
    %1542 = vmatprep.subr.mxu0 0.0
    %1543 = vmatpush1.msra.mxu0 %v1378
    %1544 = vmatprep.subr.mxu0 0.0
    %1545 = vmatpush2.msra.mxu0 0.0
    %1546 = vmatprep.subr.mxu0 0.0
    %1547 = vmatpush2.msra.mxu0 0.0
    %1548 = vmatprep.subr.mxu0 0.0
    %1549 = vmatpush2.msra.mxu0 0.0
    %1550 = vmatprep.subr.mxu0 0.0
    %1551 = vmatpush2.msra.mxu0 0.0
    %1552 = vmatprep.subr.mxu0 0.0
    %1553 = vmatpush2.msra.mxu0 0.0
    %1554 = vmatprep.subr.mxu0 0.0
    %1555 = vmatpush2.msra.mxu0 0.0
    %1556 = vmatprep.subr.mxu0 0.0
    %1557 = vmatpush2.msra.mxu0 0.0
    %1558 = vmatprep.subr.mxu0 0.0
    %1559 = vmatpush2.msra.mxu0 0.0
    %1560 = vmatprep.subr.mxu0 0.0
    %1561 = vmatpush2.msra.mxu0 0.0
    %1562 = vmatprep.subr.mxu0 0.0
    %1563 = vmatpush2.msra.mxu0 0.0
    %1564 = vmatprep.subr.mxu0 0.0
    %1565 = vmatpush2.msra.mxu0 0.0
    %1566 = vmatprep.subr.mxu0 0.0
    %1567 = vmatpush2.msra.mxu0 0.0
    %1568 = vmatprep.subr.mxu0 0.0
    %1569 = vmatpush2.msra.mxu0 0.0
    %1570 = vmatprep.subr.mxu0 0.0
    %1571 = vmatpush2.msra.mxu0 0.0
    %1572 = vmatprep.subr.mxu0 0.0
    %1573 = vmatpush2.msra.mxu0 0.0
    %1574 = vmatprep.subr.mxu0 0.0
    %1575 = vmatpush2.msra.mxu0 0.0
    %1576 = vmatprep.mubr.f32.mxu0 0.0
    %1577 = vmatmul.mubr.f32.gmra.mxu0 %v1372
    %v1578 = vpop.f32.mrf.mxu0
    %v1579 = vadd.f32 %v1484, %v1578
    %v1580 = vpop.f32.mrf.mxu0
    %1581 = vmatprep.mubr.f32.mxu0 0.0
    %1582 = vmatmul.mubr.f32.gmra.mxu0 %v1373
    %v1583 = vpop.f32.mrf.mxu0
    %v1584 = vadd.f32 %v1489, %v1583
    %v1585 = vpop.f32.mrf.mxu0
    %1586 = vmatprep.mubr.f32.mxu0 0.0
    %1587 = vmatmul.mubr.f32.gmra.mxu0 %v1374
    %v1588 = vpop.f32.mrf.mxu0
    %v1589 = vadd.f32 %v1494, %v1588
    %v1590 = vpop.f32.mrf.mxu0
    %1591 = vmatprep.mubr.f32.mxu0 0.0
    %1592 = vmatmul.mubr.f32.gmra.mxu0 %v1375
    %v1593 = vpop.f32.mrf.mxu0
    %v1594 = vadd.f32 %v1499, %v1593
    %v1595 = vpop.f32.mrf.mxu0
    %1596 = vmatprep.mubr.f32.mxu0 0.0
    %1597 = vmatmul.mubr.f32.gmra.mxu0 %v1376
    %v1598 = vpop.f32.mrf.mxu0
    %v1599 = vadd.f32 %v1504, %v1598
    %v1600 = vpop.f32.mrf.mxu0
    %1601 = vmatprep.mubr.f32.mxu0 0.0
    %1602 = vmatmul.mubr.f32.gmra.mxu0 %v1377
    %v1603 = vpop.f32.mrf.mxu0
    %v1604 = vadd.f32 %v1509, %v1603
    %v1605 = vpop.f32.mrf.mxu0
    %1606 = vdwg.mxu0
    %v1607 = vld [vmem:[#allocation3 + $0x9] sm:$0xff]
    %v1608 = vld [vmem:[#allocation3 + $0x11] sm:$0xff]
    %v1609 = vld [vmem:[#allocation3 + $0x19] sm:$0xff]
    %v1610 = vld [vmem:[#allocation3 + $0x21] sm:$0xff]
    %v1611 = vld [vmem:[#allocation3 + $0x29] sm:$0xff]
    %v1612 = vld [vmem:[#allocation3 + $0x31] sm:$0xff]
    %s1613 = scalar_lea.vmem [#allocation10], 256
    %v1614 = vld [vmem:[%s1613] sm:$0xff]
    %v1615 = vld [vmem:[%s1613 + $0x8] sm:$0xff]
    %v1616 = vld [vmem:[%s1613 + $0x10] sm:$0xff]
    %v1617 = vld [vmem:[%s1613 + $0x18] sm:$0xff]
    %v1618 = vld [vmem:[%s1613 + $0x20] sm:$0xff]
    %v1619 = vld [vmem:[%s1613 + $0x28] sm:$0xff]
    %v1620 = vld [vmem:[%s1613 + $0x30] sm:$0xff]
    %v1621 = vld [vmem:[%s1613 + $0x38] sm:$0xff]
    %v1622 = vld [vmem:[%s1613 + $0x40] sm:$0xff]
    %v1623 = vld [vmem:[%s1613 + $0x48] sm:$0xff]
    %v1624 = vld [vmem:[%s1613 + $0x50] sm:$0xff]
    %v1625 = vld [vmem:[%s1613 + $0x58] sm:$0xff]
    %v1626 = vld [vmem:[%s1613 + $0x60] sm:$0xff]
    %v1627 = vld [vmem:[%s1613 + $0x68] sm:$0xff]
    %v1628 = vld [vmem:[%s1613 + $0x70] sm:$0xff]
    %v1629 = vld [vmem:[%s1613 + $0x78] sm:$0xff]
    %1630 = vmatprep.subr.mxu0 0.0
    %1631 = vmatpush1.msra.mxu0 %v1629
    %1632 = vmatprep.subr.mxu0 0.0
    %1633 = vmatpush1.msra.mxu0 %v1628
    %1634 = vmatprep.subr.mxu0 0.0
    %1635 = vmatpush1.msra.mxu0 %v1627
    %1636 = vmatprep.subr.mxu0 0.0
    %1637 = vmatpush1.msra.mxu0 %v1626
    %1638 = vmatprep.subr.mxu0 0.0
    %1639 = vmatpush1.msra.mxu0 %v1625
    %1640 = vmatprep.subr.mxu0 0.0
    %1641 = vmatpush1.msra.mxu0 %v1624
    %1642 = vmatprep.subr.mxu0 0.0
    %1643 = vmatpush1.msra.mxu0 %v1623
    %1644 = vmatprep.subr.mxu0 0.0
    %1645 = vmatpush1.msra.mxu0 %v1622
    %1646 = vmatprep.subr.mxu0 0.0
    %1647 = vmatpush1.msra.mxu0 %v1621
    %1648 = vmatprep.subr.mxu0 0.0
    %1649 = vmatpush1.msra.mxu0 %v1620
    %1650 = vmatprep.subr.mxu0 0.0
    %1651 = vmatpush1.msra.mxu0 %v1619
    %1652 = vmatprep.subr.mxu0 0.0
    %1653 = vmatpush1.msra.mxu0 %v1618
    %1654 = vmatprep.subr.mxu0 0.0
    %1655 = vmatpush1.msra.mxu0 %v1617
    %1656 = vmatprep.subr.mxu0 0.0
    %1657 = vmatpush1.msra.mxu0 %v1616
    %1658 = vmatprep.subr.mxu0 0.0
    %1659 = vmatpush1.msra.mxu0 %v1615
    %1660 = vmatprep.subr.mxu0 0.0
    %1661 = vmatpush1.msra.mxu0 %v1614
    %1662 = vmatprep.subr.mxu0 0.0
    %1663 = vmatpush2.msra.mxu0 0.0
    %1664 = vmatprep.subr.mxu0 0.0
    %1665 = vmatpush2.msra.mxu0 0.0
    %1666 = vmatprep.subr.mxu0 0.0
    %1667 = vmatpush2.msra.mxu0 0.0
    %1668 = vmatprep.subr.mxu0 0.0
    %1669 = vmatpush2.msra.mxu0 0.0
    %1670 = vmatprep.subr.mxu0 0.0
    %1671 = vmatpush2.msra.mxu0 0.0
    %1672 = vmatprep.subr.mxu0 0.0
    %1673 = vmatpush2.msra.mxu0 0.0
    %1674 = vmatprep.subr.mxu0 0.0
    %1675 = vmatpush2.msra.mxu0 0.0
    %1676 = vmatprep.subr.mxu0 0.0
    %1677 = vmatpush2.msra.mxu0 0.0
    %1678 = vmatprep.subr.mxu0 0.0
    %1679 = vmatpush2.msra.mxu0 0.0
    %1680 = vmatprep.subr.mxu0 0.0
    %1681 = vmatpush2.msra.mxu0 0.0
    %1682 = vmatprep.subr.mxu0 0.0
    %1683 = vmatpush2.msra.mxu0 0.0
    %1684 = vmatprep.subr.mxu0 0.0
    %1685 = vmatpush2.msra.mxu0 0.0
    %1686 = vmatprep.subr.mxu0 0.0
    %1687 = vmatpush2.msra.mxu0 0.0
    %1688 = vmatprep.subr.mxu0 0.0
    %1689 = vmatpush2.msra.mxu0 0.0
    %1690 = vmatprep.subr.mxu0 0.0
    %1691 = vmatpush2.msra.mxu0 0.0
    %1692 = vmatprep.subr.mxu0 0.0
    %1693 = vmatpush2.msra.mxu0 0.0
    %1694 = vmatprep.mubr.f32.mxu0 0.0
    %1695 = vmatmul.mubr.f32.gmra.mxu0 %v1607
    %v1696 = vpop.f32.mrf.mxu0
    %v1697 = vadd.f32 0.0, %v1696
    %v1698 = vpop.f32.mrf.mxu0
    %1699 = vmatprep.mubr.f32.mxu0 0.0
    %1700 = vmatmul.mubr.f32.gmra.mxu0 %v1608
    %v1701 = vpop.f32.mrf.mxu0
    %v1702 = vadd.f32 0.0, %v1701
    %v1703 = vpop.f32.mrf.mxu0
    %1704 = vmatprep.mubr.f32.mxu0 0.0
    %1705 = vmatmul.mubr.f32.gmra.mxu0 %v1609
    %v1706 = vpop.f32.mrf.mxu0
    %v1707 = vadd.f32 0.0, %v1706
    %v1708 = vpop.f32.mrf.mxu0
    %1709 = vmatprep.mubr.f32.mxu0 0.0
    %1710 = vmatmul.mubr.f32.gmra.mxu0 %v1610
    %v1711 = vpop.f32.mrf.mxu0
    %v1712 = vadd.f32 0.0, %v1711
    %v1713 = vpop.f32.mrf.mxu0
    %1714 = vmatprep.mubr.f32.mxu0 0.0
    %1715 = vmatmul.mubr.f32.gmra.mxu0 %v1611
    %v1716 = vpop.f32.mrf.mxu0
    %v1717 = vadd.f32 0.0, %v1716
    %v1718 = vpop.f32.mrf.mxu0
    %1719 = vmatprep.mubr.f32.mxu0 0.0
    %1720 = vmatmul.mubr.f32.gmra.mxu0 %v1612
    %v1721 = vpop.f32.mrf.mxu0
    %v1722 = vadd.f32 0.0, %v1721
    %v1723 = vpop.f32.mrf.mxu0
    %1724 = vdwg.mxu0
    %v1725 = vadd.f32 %v1579, %v1697
    %v1726 = vadd.f32 %v1584, %v1702
    %v1727 = vadd.f32 %v1589, %v1707
    %v1728 = vadd.f32 %v1594, %v1712
    %v1729 = vadd.f32 %v1599, %v1717
    %v1730 = vadd.f32 %v1604, %v1722
    %v1731 = vmul.f32 %v1725, %v1088
    %v1732 = vmul.f32 %v1726, %v1093
    %v1733 = vmul.f32 %v1727, %v1098
    %v1734 = vmul.f32 %v1728, %v1103
    %v1735 = vmul.f32 %v1729, %v1108
    %v1736 = vmul.f32 %v1730, %v1113
    %v1737 = vadd.f32 %v1731, %v1732
    %v1738 = vadd.f32 %v1737, %v1733
    %v1739 = vadd.f32 %v1738, %v1734
    %v1740 = vadd.f32 %v1739, %v1735
    %v1741 = vadd.f32 %v1740, %v1736
    %v1742 = vrot.slane %v1741, 4
    %v1743 = vadd.f32 %v1741, %v1742
    %v1744 = vrot.slane %v1743, 2
    %v1745 = vadd.f32 %v1743, %v1744
    %v1746 = vrot.slane %v1745, 1
    %v1747 = vadd.f32 %v1745, %v1746
    %v1748 = vmul.f32 %v1731, %v1731
    %v1749 = vmul.f32 %v1732, %v1732
    %v1750 = vmul.f32 %v1733, %v1733
    %v1751 = vmul.f32 %v1734, %v1734
    %v1752 = vmul.f32 %v1735, %v1735
    %v1753 = vmul.f32 %v1736, %v1736
    %v1754 = vadd.f32 %v1748, %v1749
    %v1755 = vadd.f32 %v1754, %v1750
    %v1756 = vadd.f32 %v1755, %v1751
    %v1757 = vadd.f32 %v1756, %v1752
    %v1758 = vadd.f32 %v1757, %v1753
    %v1759 = vrot.slane %v1758, 4
    %v1760 = vadd.f32 %v1758, %v1759
    %v1761 = vrot.slane %v1760, 2
    %v1762 = vadd.f32 %v1760, %v1761
    %v1763 = vrot.slane %v1762, 1
    %v1764 = vadd.f32 %v1762, %v1763
    %v1765 = vsel %vm1149, %v1747, %v1764
    %1766 = vmatprep.subr.mxu0 0.0
    %1767 = vmatpush1.msra.mxu0 %v351
    %1768 = vmatprep.subr.mxu0 0.0
    %1769 = vmatpush1.msra.mxu0 %v350
    %1770 = vmatprep.subr.mxu0 0.0
    %1771 = vmatpush1.msra.mxu0 %v349
    %1772 = vmatprep.subr.mxu0 0.0
    %1773 = vmatpush1.msra.mxu0 %v348
    %1774 = vmatprep.subr.mxu0 0.0
    %1775 = vmatpush1.msra.mxu0 %v347
    %1776 = vmatprep.subr.mxu0 0.0
    %1777 = vmatpush1.msra.mxu0 %v346
    %1778 = vmatprep.subr.mxu0 0.0
    %1779 = vmatpush1.msra.mxu0 %v345
    %1780 = vmatprep.subr.mxu0 0.0
    %1781 = vmatpush1.msra.mxu0 %v344
    %1782 = vmatprep.subr.mxu0 0.0
    %1783 = vmatpush1.msra.mxu0 %v343
    %1784 = vmatprep.subr.mxu0 0.0
    %1785 = vmatpush1.msra.mxu0 %v342
    %1786 = vmatprep.subr.mxu0 0.0
    %1787 = vmatpush1.msra.mxu0 %v341
    %1788 = vmatprep.subr.mxu0 0.0
    %1789 = vmatpush1.msra.mxu0 %v340
    %1790 = vmatprep.subr.mxu0 0.0
    %1791 = vmatpush1.msra.mxu0 %v339
    %1792 = vmatprep.subr.mxu0 0.0
    %1793 = vmatpush1.msra.mxu0 %v338
    %1794 = vmatprep.subr.mxu0 0.0
    %1795 = vmatpush1.msra.mxu0 %v337
    %1796 = vmatprep.subr.mxu0 0.0
    %1797 = vmatpush1.msra.mxu0 %v336
    %1798 = vmatprep.subr.mxu0 0.0
    %1799 = vmatpush2.msra.mxu0 0.0
    %1800 = vmatprep.subr.mxu0 0.0
    %1801 = vmatpush2.msra.mxu0 0.0
    %1802 = vmatprep.subr.mxu0 0.0
    %1803 = vmatpush2.msra.mxu0 0.0
    %1804 = vmatprep.subr.mxu0 0.0
    %1805 = vmatpush2.msra.mxu0 0.0
    %1806 = vmatprep.subr.mxu0 0.0
    %1807 = vmatpush2.msra.mxu0 0.0
    %1808 = vmatprep.subr.mxu0 0.0
    %1809 = vmatpush2.msra.mxu0 0.0
    %1810 = vmatprep.subr.mxu0 0.0
    %1811 = vmatpush2.msra.mxu0 0.0
    %1812 = vmatprep.subr.mxu0 0.0
    %1813 = vmatpush2.msra.mxu0 0.0
    %1814 = vmatprep.subr.mxu0 0.0
    %1815 = vmatpush2.msra.mxu0 0.0
    %1816 = vmatprep.subr.mxu0 0.0
    %1817 = vmatpush2.msra.mxu0 0.0
    %1818 = vmatprep.subr.mxu0 0.0
    %1819 = vmatpush2.msra.mxu0 0.0
    %1820 = vmatprep.subr.mxu0 0.0
    %1821 = vmatpush2.msra.mxu0 0.0
    %1822 = vmatprep.subr.mxu0 0.0
    %1823 = vmatpush2.msra.mxu0 0.0
    %1824 = vmatprep.subr.mxu0 0.0
    %1825 = vmatpush2.msra.mxu0 0.0
    %1826 = vmatprep.subr.mxu0 0.0
    %1827 = vmatpush2.msra.mxu0 0.0
    %1828 = vmatprep.subr.mxu0 0.0
    %1829 = vmatpush2.msra.mxu0 0.0
    %1830 = vmatprep.mubr.f32.mxu0 0.0
    %1831 = vmatmul.mubr.f32.gmra.mxu0 %v1765
    %v1832 = vpop.f32.mrf.mxu0
    %v1833 = vadd.f32 0.0, %v1832
    %v1834 = vpop.f32.mrf.mxu0
    %1835 = vdwg.mxu0
    %v1836 = vmul.f32 %v1833, 0.001953125
    %v1837 = vmul.f32 %v1836, %v1836
    %v1839 = vrot.slane %v1837, 7
    %v1841 = vsub.f32 %v1836, %v1839
    %v1842 = vadd.f32 %v1841, 1e-05
    %v1843 = vrsqrt.pop %v1842
    %v1846 = vunpack.c.l.s4 1966171168
    %v1847 = vunpack.c.0.s8 %v1846
    %v1848 = vlaneseq
    %v1849 = vshrl.u32 %v1848, 7
    %v1850 = vsub.s32 %v1847, %v1849
    %v1851 = vrot.slane %v1843, %v1850
    %v1852 = vcombine.high %v1851, %v1851
    %v1854 = vunpack.c.l.s4 1966171168
    %v1855 = vunpack.c.0.s8 %v1854
    %v1856 = vlaneseq
    %v1857 = vshrl.u32 %v1856, 7
    %v1858 = vsub.s32 %v1855, %v1857
    %v1859 = vrot.slane %v1852, %v1858
    %v1861 = vmul.f32 %v1370, %v1859
    %v1862 = vmul.f32 %v1836, %v1861
    %v1863 = vsub.f32 %v1371, %v1862
    %v1865 = vlaneseq
    %v1866 = vshrl.u32 %v1865, 7
    %v1867 = vsub.s32 0, %v1866
    %v1868 = vrot.slane %v1863, %v1867
    %v1870 = vsel %vm1149, %v1861, %v1868
    %v1872 = vsel %vm1256, %v1870, 0
    %1874 = vmatprep.subr.mxu0 0.0
    %1875 = vmatpush1.msra.mxu0 0.0
    %1876 = vmatprep.subr.mxu0 0.0
    %1877 = vmatpush1.msra.mxu0 0.0
    %1878 = vmatprep.subr.mxu0 0.0
    %1879 = vmatpush1.msra.mxu0 0.0
    %1880 = vmatprep.subr.mxu0 0.0
    %1881 = vmatpush1.msra.mxu0 0.0
    %1882 = vmatprep.subr.mxu0 0.0
    %1883 = vmatpush1.msra.mxu0 0.0
    %1884 = vmatprep.subr.mxu0 0.0
    %1885 = vmatpush1.msra.mxu0 0.0
    %1886 = vmatprep.subr.mxu0 0.0
    %1887 = vmatpush1.msra.mxu0 0.0
    %1888 = vmatprep.subr.mxu0 0.0
    %1889 = vmatpush1.msra.mxu0 0.0
    %1890 = vmatprep.subr.mxu0 0.0
    %1891 = vmatpush1.msra.mxu0 0.0
    %1892 = vmatprep.subr.mxu0 0.0
    %1893 = vmatpush1.msra.mxu0 0.0
    %1894 = vmatprep.subr.mxu0 0.0
    %1895 = vmatpush1.msra.mxu0 0.0
    %1896 = vmatprep.subr.mxu0 0.0
    %1897 = vmatpush1.msra.mxu0 0.0
    %1898 = vmatprep.subr.mxu0 0.0
    %1899 = vmatpush1.msra.mxu0 0.0
    %1900 = vmatprep.subr.mxu0 0.0
    %1901 = vmatpush1.msra.mxu0 0.0
    %1902 = vmatprep.subr.mxu0 0.0
    %1903 = vmatpush1.msra.mxu0 0.0
    %1904 = vmatprep.subr.mxu0 0.0
    %1905 = vmatpush1.msra.mxu0 %v352
    %1906 = vmatprep.subr.mxu0 0.0
    %1907 = vmatpush2.msra.mxu0 0.0
    %1908 = vmatprep.subr.mxu0 0.0
    %1909 = vmatpush2.msra.mxu0 0.0
    %1910 = vmatprep.subr.mxu0 0.0
    %1911 = vmatpush2.msra.mxu0 0.0
    %1912 = vmatprep.subr.mxu0 0.0
    %1913 = vmatpush2.msra.mxu0 0.0
    %1914 = vmatprep.subr.mxu0 0.0
    %1915 = vmatpush2.msra.mxu0 0.0
    %1916 = vmatprep.subr.mxu0 0.0
    %1917 = vmatpush2.msra.mxu0 0.0
    %1918 = vmatprep.subr.mxu0 0.0
    %1919 = vmatpush2.msra.mxu0 0.0
    %1920 = vmatprep.subr.mxu0 0.0
    %1921 = vmatpush2.msra.mxu0 0.0
    %1922 = vmatprep.subr.mxu0 0.0
    %1923 = vmatpush2.msra.mxu0 0.0
    %1924 = vmatprep.subr.mxu0 0.0
    %1925 = vmatpush2.msra.mxu0 0.0
    %1926 = vmatprep.subr.mxu0 0.0
    %1927 = vmatpush2.msra.mxu0 0.0
    %1928 = vmatprep.subr.mxu0 0.0
    %1929 = vmatpush2.msra.mxu0 0.0
    %1930 = vmatprep.subr.mxu0 0.0
    %1931 = vmatpush2.msra.mxu0 0.0
    %1932 = vmatprep.subr.mxu0 0.0
    %1933 = vmatpush2.msra.mxu0 0.0
    %1934 = vmatprep.subr.mxu0 0.0
    %1935 = vmatpush2.msra.mxu0 0.0
    %1936 = vmatprep.subr.mxu0 0.0
    %1937 = vmatpush2.msra.mxu0 0.0
    %1938 = vmatprep.mubr.f32.mxu0 0.0
    %1939 = vmatmul.mubr.f32.gmra.mxu0 %v1872
    %v1940 = vpop.f32.mrf.mxu0
    %v1941 = vadd.f32 0.0, %v1940
    %v1942 = vpop.f32.mrf.mxu0
    %1943 = vdwg.mxu0
    %v1944 = vlaneseq
    %v1945 = vshrl.u32 %v1944, 7
    %v1946 = vsub.s32 0, %v1945
    %v1947 = vrot.slane %v1941, %v1946
    %v1948 = vmul.f32 %v1725, %v1947
    %v1949 = vmul.f32 %v1726, %v1947
    %v1950 = vmul.f32 %v1728, %v1947
    %v1951 = vmul.f32 %v1729, %v1947
    %v1952 = vlaneseq
    %v1953 = vshrl.u32 %v1952, 7
    %v1954 = vsub.s32 1, %v1953
    %v1955 = vrot.slane %v1941, %v1954
    %v1956 = vadd.f32 %v1948, %v1955
    %v1957 = vadd.f32 %v1949, %v1955
    %v1958 = vadd.f32 %v1950, %v1955
    %v1959 = vadd.f32 %v1951, %v1955
    %v1960 = vmax.f32 %v1956, 0.0
    %v1961 = vmax.f32 %v1957, 0.0
    %v1962 = vmax.f32 %v1958, 0.0
    %v1963 = vmax.f32 %v1959, 0.0
    %v1964 = vmul.f32 %v1960, %v1088
    %v1965 = vmul.f32 %v1961, %v1093
    %v1966 = vmul.f32 %v1962, %v1103
    %v1967 = vmul.f32 %v1963, %v1108
    %1968 = vst [vmem:[#allocation12] sm:$0xff] %v1964
    %1969 = vst [vmem:[#allocation12 + $0x8] sm:$0xff] %v1965
    %1970 = vst [vmem:[#allocation12 + $0x10] sm:$0xff] %v1966
    %1971 = vst [vmem:[#allocation12 + $0x18] sm:$0xff] %v1967
    // Predicated region
    $region78: #{tpu_custom_call.1} parent=1 // pred_check
      _
    $region79: #{tpu_custom_call.1} parent=1 // pred_check_branch
      %1973 = sbr.rel (0) target = $region81
    $region80: #{tpu_custom_call.1} parent=1 // pred_region
      %s1975 = ssub.s32 512, 512
      %1976 = vsyncadd [#allocation6], %s1975
      %s1977 = sshll.u32 [#allocation12], 4
      %s1978 = int_to_ptr.vmem [resolvable:$true] %s1977
      %1983 = dma.vmem_to_hbm [thread:$0]  %s1978, 512, %s15, [#allocation6], 128, 128, 8
    $region81: #{tpu_custom_call.1} parent=1 // pred_fallthru
      _
    // Predicated region
    $region82: #{tpu_custom_call.1} parent=1 // pred_check
      _
    $region83: #{tpu_custom_call.1} parent=1 // pred_check_branch
      %1985 = sbr.rel (0) target = $region85
    $region84: #{tpu_custom_call.1} parent=1 // pred_region
      %1986 = dma.done [#allocation6], 512
    $region85: #{tpu_custom_call.1} parent=1 // pred_fallthru
      _
    %1987 = vsyncpa [#allocation5], 1
    %1988 = vsyncpa [#allocation8], 1
    %1989 = vsyncpa [#allocation11], 1
    %1990 = vsyncpa [#allocation6], 1

</llo_original>
